<compile_context>
chip_gen: v6e
topology: v6e:2x2x1
jax: 0.10.0
libtpu: 0.0.40
codegen_flags: <defaults>
</compile_context>

<pallas_src>
import functools

import jax
import jax.numpy as jnp
from jax import lax
from jax.experimental import pallas as pl
from jax.experimental.pallas import tpu as pltpu


def _round_up(n, m):
    return ((n + m - 1) // m) * m


def _pick_batch_tile(batch):
    """Batch padding + tile: fat per-step matmuls, >=2 tiles when batch allows."""
    bp8 = _round_up(batch, 8)
    n_tiles = max(1, -(-bp8 // 256))          # cap tile height at one MXU pass
    if n_tiles == 1 and bp8 >= 256:
        n_tiles = 2                            # let "parallel" shard across 2 TCs
    tb = _round_up(-(-bp8 // n_tiles), 8)
    return n_tiles * tb, tb


# Kernel operands (one (batch tile, time chunk) grid cell; time-major, lane=feature):
#   dt    : (TC, TB, 1)     f32   dt at global step 0 is 0
#   x     : (TC, TB, D_in)  f32
#   y0    : (TB, D_out)     f32
#   w_enc : (D_out, Hp)   b_enc : (1, Hp)
#   w_fz  : (Hp, Hp)      w_fx  : (D_in, Hp)   b_f : (1, Hp)
#   w_dec : (Hp, Dop)     b_dec : (1, Dop)
#   y     : (TC, TB, Dop)   f32   output
#   z_buf : (TC, TB, Hp)    f32   z output (return_z=True) or VMEM scratch;
#                                 holds u_k until step k overwrites it with z_k
#   z_c   : (TB, Hp)        f32   VMEM scratch, z carried across time chunks
def _ivp_euler_kernel(dt_ref, x_ref, y0_ref,
                      w_enc_ref, b_enc_ref,
                      w_fz_ref, w_fx_ref, b_f_ref,
                      w_dec_ref, b_dec_ref,
                      y_ref, z_buf, z_c,
                      *, compute_dtype, unroll):
    TC, TB, D_in = x_ref.shape
    Hp = w_fz_ref.shape[0]
    cdt = compute_dtype

    # Encoder only on the first time chunk; z_c persists across chunks
    # (the time-chunk grid axis is innermost / "arbitrary").
    @pl.when(pl.program_id(1) == 0)
    def _():
        z_c[...] = (jnp.dot(y0_ref[...].astype(cdt), w_enc_ref[...],
                            preferred_element_type=jnp.float32)
                    + b_enc_ref[...])

    # Hoisted input projection for the whole chunk, written straight into the
    # merged u/z buffer (one big lane-dense matmul instead of TC tiny ones).
    x_flat = x_ref[...].reshape(TC * TB, D_in).astype(cdt)
    u = jnp.dot(x_flat, w_fx_ref[...],
                preferred_element_type=jnp.float32) + b_f_ref[...]
    z_buf[...] = u.reshape(TC, TB, Hp)

    # Serial Euler recurrence: only z_prev @ W_fz + tanh + FMA on the critical
    # path.  dt at global step 0 is 0, so step 0 of chunk 0 reproduces z_0.
    def step(k, z_prev):
        dz = jnp.tanh(
            jnp.dot(z_prev.astype(cdt), w_fz_ref[...],
                    preferred_element_type=jnp.float32)
            + z_buf[k])
        z_new = z_prev + dt_ref[k] * dz
        z_buf[k] = z_new
        return z_new

    z_last = lax.fori_loop(0, TC, step, z_c[...], unroll=unroll)
    z_c[...] = z_last

    # Hoisted decoder: one lane-dense matmul over the whole chunk + unmasked
    # 128-lane stores.
    z_all = z_buf[...].reshape(TC * TB, Hp).astype(cdt)
    y = jnp.dot(z_all, w_dec_ref[...],
                preferred_element_type=jnp.float32) + b_dec_ref[...]
    y_ref[...] = y.reshape(TC, TB, y_ref.shape[2])


def init_params(key, d_in, d_out, hidden):
    ks = jax.random.split(key, 5)
    s = 0.3
    return {
        "w_enc": s * jax.random.normal(ks[0], (d_out, hidden), jnp.float32),
        "b_enc": jnp.zeros((1, hidden), jnp.float32),
        "w_fz": s * jax.random.normal(ks[1], (hidden, hidden), jnp.float32),
        "w_fx": s * jax.random.normal(ks[2], (d_in, hidden), jnp.float32),
        "b_f": 0.01 * jnp.ones((1, hidden), jnp.float32),
        "w_dec": s * jax.random.normal(ks[3], (hidden, d_out), jnp.float32),
        "b_dec": jnp.zeros((1, d_out), jnp.float32),
    }


def ivp_forward(params, t, x, y_0, return_z=False,
                matmul_dtype=jnp.float32, time_chunk=None):
    """IVPRegressionModel.forward: t (B,T), x (B,T,D_in), y_0 (B,D_out)."""
    B, T = t.shape
    D_in = x.shape[-1]
    H = params["w_fz"].shape[0]
    D_out = params["w_dec"].shape[1]
    f32 = jnp.float32
    mdt = matmul_dtype
    w_bytes = 2 if mdt == jnp.bfloat16 else 4

    # --- TPU-native padding: 128 lanes, 8 sublanes ---------------------------
    Hp = _round_up(H, 128)
    Dop = _round_up(D_out, 128)
    Bp, TB = _pick_batch_tile(B)

    # --- time chunking (bounds VMEM independent of T) ------------------------
    if time_chunk is not None:
        TC = _round_up(int(time_chunk), 8)
    else:
        TC = min(64, _round_up(T, 8))

    def vmem_needed(tc):
        act = 4 * (2 * tc * TB * (1 + D_in)                 # dt + x (dbl buf)
                   + 2 * tc * TB * Dop                       # y out (dbl buf)
                   + (2 if return_z else 1) * tc * TB * Hp   # z out / scratch
                   + TB * Hp                                  # z carry
                   + 2 * TB * D_out)                          # y0 (dbl buf)
        wts = 2 * w_bytes * (D_out * Hp + Hp * Hp + D_in * Hp + Hp * Dop)
        bias = 2 * 4 * (3 * Hp + Dop)
        return act + wts + bias + (2 << 20)                   # slack

    # Generation-aware VMEM budget (v7x has only 64 MiB per core).
    try:
        phys_vmem = int(pltpu.get_tpu_info().vmem_capacity_bytes)
    except Exception:
        phys_vmem = 64 * 2**20
    budget = (phys_vmem * 7) // 8
    while vmem_needed(TC) > budget and TC > 8:
        TC = max(8, TC - 8)
    vmem_limit = int(min(budget, max(vmem_needed(TC), 16 * 2**20)))

    Tp = _round_up(T, TC)
    nb, nc = Bp // TB, Tp // TC
    grid = (nb, nc)

    # --- parameters: pad with zeros, matmul operands cast to matmul_dtype ----
    def pad2(a, r, c, dtype):
        return jnp.pad(a.astype(f32),
                       ((0, r - a.shape[0]), (0, c - a.shape[1]))).astype(dtype)

    w_enc = pad2(params["w_enc"], D_out, Hp, mdt)
    b_enc = pad2(params["b_enc"], 1, Hp, f32)
    w_fz = pad2(params["w_fz"], Hp, Hp, mdt)
    w_fx = pad2(params["w_fx"], D_in, Hp, mdt)
    b_f = pad2(params["b_f"], 1, Hp, f32)
    w_dec = pad2(params["w_dec"], Hp, Dop, mdt)
    b_dec = pad2(params["b_dec"], 1, Dop, f32)

    # dt precomputed here (dt[0]=0) -> loop carry shrinks to z only.
    t32 = t.astype(f32)
    dt = jnp.concatenate([jnp.zeros((B, 1), f32), t32[:, 1:] - t32[:, :-1]],
                         axis=1)                                       # (B, T)
    dt_tm = jnp.transpose(jnp.pad(dt, ((0, Bp - B), (0, Tp - T))))[:, :, None]
    x_tm = jnp.transpose(
        jnp.pad(x.astype(f32), ((0, Bp - B), (0, Tp - T), (0, 0))), (1, 0, 2))
    y0 = jnp.pad(y_0.astype(f32), ((0, Bp - B), (0, 0)))               # (Bp, D_out)

    def chunked(d2):
        return pl.BlockSpec((TC, TB, d2), lambda i, c: (c, i, 0))

    def full2(r, c_):
        return pl.BlockSpec((r, c_), lambda i, c: (0, 0))

    in_specs = [
        chunked(1),                                         # dt
        chunked(D_in),                                      # x
        pl.BlockSpec((TB, D_out), lambda i, c: (i, 0)),     # y0
        full2(D_out, Hp), full2(1, Hp),                     # encoder
        full2(Hp, Hp), full2(D_in, Hp), full2(1, Hp),       # dynamics
        full2(Hp, Dop), full2(1, Dop),                      # decoder
    ]

    z_carry = pltpu.VMEM((TB, Hp), f32)
    if return_z:
        out_specs = (chunked(Dop), chunked(Hp))
        out_shape = (jax.ShapeDtypeStruct((Tp, Bp, Dop), f32),
                     jax.ShapeDtypeStruct((Tp, Bp, Hp), f32))
        scratch_shapes = [z_carry]                 # z output block doubles as z_buf
    else:
        out_specs = chunked(Dop)
        out_shape = jax.ShapeDtypeStruct((Tp, Bp, Dop), f32)
        # z never leaves VMEM when the latent is not requested.
        scratch_shapes = [pltpu.VMEM((TC, TB, Hp), f32), z_carry]

    kernel = functools.partial(_ivp_euler_kernel,
                               compute_dtype=mdt,
                               unroll=(True if TC <= 16 else 8))

    outs = pl.pallas_call(
        kernel,
        grid=grid,
        in_specs=in_specs,
        out_specs=out_specs,
        out_shape=out_shape,
        scratch_shapes=scratch_shapes,
        compiler_params=pltpu.CompilerParams(
            dimension_semantics=("parallel", "arbitrary"),
            vmem_limit_bytes=vmem_limit),
    )(dt_tm, x_tm, y0, w_enc, b_enc, w_fz, w_fx, b_f, w_dec, b_dec)

    # Slice before transposing so the transpose only touches (T, B, D_out/H).
    if return_z:
        y_tm, z_tm = outs
        y_hat = jnp.transpose(y_tm[:T, :B, :D_out], (1, 0, 2))
        z = jnp.transpose(z_tm[:T, :B, :H], (1, 0, 2))
        return y_hat, z
    return jnp.transpose(outs[:T, :B, :D_out], (1, 0, 2))


def ivp_forward_ref(params, t, x, y_0):
    """Pure-JAX reference of the same forward pass (for validation)."""
    B, T = t.shape
    z = y_0 @ params["w_enc"] + params["b_enc"]
    ys = [z @ params["w_dec"] + params["b_dec"]]
    zs = [z]
    for k in range(1, T):
        dt = (t[:, k] - t[:, k - 1])[:, None]
        dz = jnp.tanh(z @ params["w_fz"] + x[:, k] @ params["w_fx"]
                      + params["b_f"])
        z = z + dt * dz
        zs.append(z)
        ys.append(z @ params["w_dec"] + params["b_dec"])
    return jnp.stack(ys, axis=1), jnp.stack(zs, axis=1)


if __name__ == "__main__":
    B, T, D_IN, D_OUT, HIDDEN = 2, 8, 4, 3, 32

    key = jax.random.PRNGKey(0)
    k_p, k_t, k_x, k_y0 = jax.random.split(key, 4)
    params = init_params(k_p, D_IN, D_OUT, HIDDEN)

    # strictly increasing per-batch time grid
    t = jnp.cumsum(
        jax.random.uniform(k_t, (B, T), jnp.float32, minval=0.05, maxval=0.15),
        axis=1)
    x = jax.random.normal(k_x, (B, T, D_IN), jnp.float32)
    y_0 = jax.random.normal(k_y0, (B, D_OUT), jnp.float32)

    fwd_z = jax.jit(functools.partial(ivp_forward, return_z=True))
    fwd = jax.jit(ivp_forward)

    y_hat, z = fwd_z(params, t, x, y_0)
    y_only = fwd(params, t, x, y_0)          # return_z=False path (z VMEM-only)
    jax.block_until_ready((y_hat, z, y_only))

    y_ref, z_ref = ivp_forward_ref(params, t, x, y_0)
    assert y_hat.shape == (B, T, D_OUT) and z.shape == (B, T, HIDDEN)
    assert jnp.max(jnp.abs(y_hat - y_ref)) < 5e-3
    assert jnp.max(jnp.abs(z - z_ref)) < 5e-3
    assert jnp.max(jnp.abs(y_only - y_ref)) < 5e-3

    # Multi-chunk path (time-chunk grid axis + z carry across chunks) and
    # padded batch rows, still at small shapes.
    B2, T2 = 3, 24
    k_t2, k_x2, k_y02 = jax.random.split(jax.random.PRNGKey(1), 3)
    t2 = jnp.cumsum(
        jax.random.uniform(k_t2, (B2, T2), jnp.float32, minval=0.05, maxval=0.15),
        axis=1)
    x2 = jax.random.normal(k_x2, (B2, T2, D_IN), jnp.float32)
    y_02 = jax.random.normal(k_y02, (B2, D_OUT), jnp.float32)

    fwd_chunked = jax.jit(functools.partial(ivp_forward, return_z=True,
                                            time_chunk=8))
    y2, z2 = fwd_chunked(params, t2, x2, y_02)
    jax.block_until_ready((y2, z2))
    y2_ref, z2_ref = ivp_forward_ref(params, t2, x2, y_02)
    assert jnp.max(jnp.abs(y2 - y2_ref)) < 5e-3
    assert jnp.max(jnp.abs(z2 - z2_ref)) < 5e-3

    # bf16 MXU-operand path (f32 accumulation / carry), looser tolerance.
    fwd_bf16 = jax.jit(functools.partial(ivp_forward, return_z=True,
                                         matmul_dtype=jnp.bfloat16))
    y_b, z_b = fwd_bf16(params, t, x, y_0)
    jax.block_until_ready((y_b, z_b))
    assert jnp.max(jnp.abs(y_b - y_ref)) < 3e-2
    assert jnp.max(jnp.abs(z_b - z_ref)) < 3e-2

    print("KERNEL_OK")
</pallas_src>

<mosaic_0001>
module attributes {stable_mosaic.version = 11 : i64} {
  func.func @_ivp_euler_kernel(%arg0: i32, %arg1: i32, %arg2: memref<8x8x1xf32, #tpu.memory_space<vmem>>, %arg3: memref<8x8x4xf32, #tpu.memory_space<vmem>>, %arg4: memref<8x3xf32, #tpu.memory_space<vmem>>, %arg5: memref<3x128xf32, #tpu.memory_space<vmem>>, %arg6: memref<1x128xf32, #tpu.memory_space<vmem>>, %arg7: memref<128x128xf32, #tpu.memory_space<vmem>>, %arg8: memref<4x128xf32, #tpu.memory_space<vmem>>, %arg9: memref<1x128xf32, #tpu.memory_space<vmem>>, %arg10: memref<128x128xf32, #tpu.memory_space<vmem>>, %arg11: memref<1x128xf32, #tpu.memory_space<vmem>>, %arg12: memref<8x8x128xf32, #tpu.memory_space<vmem>>, %arg13: memref<8x8x128xf32, #tpu.memory_space<vmem>>, %arg14: memref<8x128xf32, #tpu.memory_space<vmem>>) attributes {dimension_semantics = [#tpu.dimension_semantics<parallel>, #tpu.dimension_semantics<arbitrary>], iteration_bounds = array<i64: 1, 1>, scalar_prefetch = 0 : i64, scratch_operands = 1 : i64, tpu.core_type = #tpu.core_type<tc>, window_params = [{transform_indices = @transform_0, window_bounds = array<i64: 8, 8, 1>}, {transform_indices = @transform_1, window_bounds = array<i64: 8, 8, 4>}, {transform_indices = @transform_2, window_bounds = array<i64: 8, 3>}, {pipeline_mode = #tpu.pipeline_mode<synchronous>, transform_indices = @transform_3, window_bounds = array<i64: 3, 128>}, {pipeline_mode = #tpu.pipeline_mode<synchronous>, transform_indices = @transform_4, window_bounds = array<i64: 1, 128>}, {pipeline_mode = #tpu.pipeline_mode<synchronous>, transform_indices = @transform_5, window_bounds = array<i64: 128, 128>}, {pipeline_mode = #tpu.pipeline_mode<synchronous>, transform_indices = @transform_6, window_bounds = array<i64: 4, 128>}, {pipeline_mode = #tpu.pipeline_mode<synchronous>, transform_indices = @transform_7, window_bounds = array<i64: 1, 128>}, {pipeline_mode = #tpu.pipeline_mode<synchronous>, transform_indices = @transform_8, window_bounds = array<i64: 128, 128>}, {pipeline_mode = #tpu.pipeline_mode<synchronous>, transform_indices = @transform_9, window_bounds = array<i64: 1, 128>}, {transform_indices = @transform_10, window_bounds = array<i64: 8, 8, 128>}, {transform_indices = @transform_11, window_bounds = array<i64: 8, 8, 128>}]} {
    %c0_i32 = arith.constant 0 : i32
    %0 = arith.cmpi eq, %arg1, %c0_i32 : i32
    %1 = arith.extui %0 : i1 to i32
    %c0_i32_0 = arith.constant 0 : i32
    %2 = arith.cmpi ne, %1, %c0_i32_0 : i32
    scf.if %2 {
      %c0_98 = arith.constant 0 : index
      %c0_99 = arith.constant 0 : index
      %159 = vector.load %arg4[%c0_98, %c0_99] : memref<8x3xf32, #tpu.memory_space<vmem>>, vector<8x3xf32>
      %c0_100 = arith.constant 0 : index
      %c0_101 = arith.constant 0 : index
      %160 = vector.load %arg5[%c0_100, %c0_101] : memref<3x128xf32, #tpu.memory_space<vmem>>, vector<3x128xf32>
      %cst_102 = arith.constant dense<0.000000e+00> : vector<8x128xf32>
      %161 = tpu.matmul %159, %160, %cst_102 {dimension_numbers = #tpu.dot_dimension_numbers<[1], [0], [0], [1], [0, 0, 1, 1], [], []>} : vector<8x3xf32>, vector<3x128xf32>, vector<8x128xf32> -> vector<8x128xf32>
      %c0_103 = arith.constant 0 : index
      %c0_104 = arith.constant 0 : index
      %162 = vector.load %arg6[%c0_103, %c0_104] : memref<1x128xf32, #tpu.memory_space<vmem>>, vector<1x128xf32>
      %163 = vector.broadcast %162 : vector<1x128xf32> to vector<8x128xf32>
      %164 = arith.addf %161, %163 : vector<8x128xf32>
      %c0_105 = arith.constant 0 : index
      %c0_106 = arith.constant 0 : index
      %165 = vector.load %arg14[%c0_105, %c0_106] : memref<8x128xf32, #tpu.memory_space<vmem>>, vector<8x128xf32>
      tpu.vector_store %arg14[%c0_105, %c0_106], %164 {strides = array<i32>} : memref<8x128xf32, #tpu.memory_space<vmem>>, vector<8x128xf32>,
    } else {
    }
    %c0 = arith.constant 0 : index
    %c0_1 = arith.constant 0 : index
    %c0_2 = arith.constant 0 : index
    %3 = vector.load %arg3[%c0, %c0_1, %c0_2] : memref<8x8x4xf32, #tpu.memory_space<vmem>>, vector<8x8x4xf32>
    %4 = vector.shape_cast %3 : vector<8x8x4xf32> to vector<64x4xf32>
    %c0_3 = arith.constant 0 : index
    %c0_4 = arith.constant 0 : index
    %5 = vector.load %arg8[%c0_3, %c0_4] : memref<4x128xf32, #tpu.memory_space<vmem>>, vector<4x128xf32>
    %cst = arith.constant dense<0.000000e+00> : vector<64x128xf32>
    %6 = tpu.matmul %4, %5, %cst {dimension_numbers = #tpu.dot_dimension_numbers<[1], [0], [0], [1], [0, 0, 1, 1], [], []>} : vector<64x4xf32>, vector<4x128xf32>, vector<64x128xf32> -> vector<64x128xf32>
    %c0_5 = arith.constant 0 : index
    %c0_6 = arith.constant 0 : index
    %7 = vector.load %arg9[%c0_5, %c0_6] : memref<1x128xf32, #tpu.memory_space<vmem>>, vector<1x128xf32>
    %8 = vector.broadcast %7 : vector<1x128xf32> to vector<64x128xf32>
    %9 = arith.addf %6, %8 : vector<64x128xf32>
    %10 = vector.shape_cast %9 : vector<64x128xf32> to vector<8x8x128xf32>
    %c0_7 = arith.constant 0 : index
    %c0_8 = arith.constant 0 : index
    %c0_9 = arith.constant 0 : index
    %11 = vector.load %arg13[%c0_7, %c0_8, %c0_9] : memref<8x8x128xf32, #tpu.memory_space<vmem>>, vector<8x8x128xf32>
    tpu.vector_store %arg13[%c0_7, %c0_8, %c0_9], %10 {strides = array<i32>} : memref<8x8x128xf32, #tpu.memory_space<vmem>>, vector<8x8x128xf32>,
    %c0_10 = arith.constant 0 : index
    %c0_11 = arith.constant 0 : index
    %12 = vector.load %arg14[%c0_10, %c0_11] : memref<8x128xf32, #tpu.memory_space<vmem>>, vector<8x128xf32>
    %c0_i32_12 = arith.constant 0 : i32
    %c0_13 = arith.constant 0 : index
    %c0_14 = arith.constant 0 : index
    %13 = vector.load %arg7[%c0_13, %c0_14] : memref<128x128xf32, #tpu.memory_space<vmem>>, vector<128x128xf32>
    %cst_15 = arith.constant dense<0.000000e+00> : vector<8x128xf32>
    %14 = tpu.matmul %12, %13, %cst_15 {dimension_numbers = #tpu.dot_dimension_numbers<[1], [0], [0], [1], [0, 0, 1, 1], [], []>} : vector<8x128xf32>, vector<128x128xf32>, vector<8x128xf32> -> vector<8x128xf32>
    %15 = arith.index_cast %c0_i32_12 : i32 to index
    %c0_16 = arith.constant 0 : index
    %c0_17 = arith.constant 0 : index
    %16 = vector.load %arg13[%15, %c0_16, %c0_17] : memref<8x8x128xf32, #tpu.memory_space<vmem>>, vector<1x8x128xf32>
    %17 = vector.shape_cast %16 : vector<1x8x128xf32> to vector<8x128xf32>
    %18 = arith.addf %14, %17 : vector<8x128xf32>
    %19 = math.tanh %18 : vector<8x128xf32>
    %20 = arith.index_cast %c0_i32_12 : i32 to index
    %c0_18 = arith.constant 0 : index
    %c0_19 = arith.constant 0 : index
    %21 = vector.load %arg2[%20, %c0_18, %c0_19] : memref<8x8x1xf32, #tpu.memory_space<vmem>>, vector<1x8x1xf32>
    %22 = vector.shape_cast %21 : vector<1x8x1xf32> to vector<8x1xf32>
    %23 = vector.broadcast %22 : vector<8x1xf32> to vector<8x128xf32>
    %24 = arith.mulf %23, %19 : vector<8x128xf32>
    %25 = arith.addf %12, %24 : vector<8x128xf32>
    %26 = arith.index_cast %c0_i32_12 : i32 to index
    %c0_20 = arith.constant 0 : index
    %c0_21 = arith.constant 0 : index
    %27 = vector.load %arg13[%26, %c0_20, %c0_21] : memref<8x8x128xf32, #tpu.memory_space<vmem>>, vector<1x8x128xf32>
    %28 = vector.shape_cast %27 : vector<1x8x128xf32> to vector<8x128xf32>
    %29 = vector.shape_cast %25 : vector<8x128xf32> to vector<1x8x128xf32>
    tpu.vector_store %arg13[%26, %c0_20, %c0_21], %29 {strides = array<i32>} : memref<8x8x128xf32, #tpu.memory_space<vmem>>, vector<1x8x128xf32>,
    %c1_i32 = arith.constant 1 : i32
    %c0_22 = arith.constant 0 : index
    %c0_23 = arith.constant 0 : index
    %30 = vector.load %arg7[%c0_22, %c0_23] : memref<128x128xf32, #tpu.memory_space<vmem>>, vector<128x128xf32>
    %cst_24 = arith.constant dense<0.000000e+00> : vector<8x128xf32>
    %31 = tpu.matmul %25, %30, %cst_24 {dimension_numbers = #tpu.dot_dimension_numbers<[1], [0], [0], [1], [0, 0, 1, 1], [], []>} : vector<8x128xf32>, vector<128x128xf32>, vector<8x128xf32> -> vector<8x128xf32>
    %32 = arith.index_cast %c1_i32 : i32 to index
    %c0_25 = arith.constant 0 : index
    %c0_26 = arith.constant 0 : index
    %33 = vector.load %arg13[%32, %c0_25, %c0_26] : memref<8x8x128xf32, #tpu.memory_space<vmem>>, vector<1x8x128xf32>
    %34 = vector.shape_cast %33 : vector<1x8x128xf32> to vector<8x128xf32>
    %35 = arith.addf %31, %34 : vector<8x128xf32>
    %36 = math.tanh %35 : vector<8x128xf32>
    %37 = arith.index_cast %c1_i32 : i32 to index
    %c0_27 = arith.constant 0 : index
    %c0_28 = arith.constant 0 : index
    %38 = vector.load %arg2[%37, %c0_27, %c0_28] : memref<8x8x1xf32, #tpu.memory_space<vmem>>, vector<1x8x1xf32>
    %39 = vector.shape_cast %38 : vector<1x8x1xf32> to vector<8x1xf32>
    %40 = vector.broadcast %39 : vector<8x1xf32> to vector<8x128xf32>
    %41 = arith.mulf %40, %36 : vector<8x128xf32>
    %42 = arith.addf %25, %41 : vector<8x128xf32>
    %43 = arith.index_cast %c1_i32 : i32 to index
    %c0_29 = arith.constant 0 : index
    %c0_30 = arith.constant 0 : index
    %44 = vector.load %arg13[%43, %c0_29, %c0_30] : memref<8x8x128xf32, #tpu.memory_space<vmem>>, vector<1x8x128xf32>
    %45 = vector.shape_cast %44 : vector<1x8x128xf32> to vector<8x128xf32>
    %46 = vector.shape_cast %42 : vector<8x128xf32> to vector<1x8x128xf32>
    tpu.vector_store %arg13[%43, %c0_29, %c0_30], %46 {strides = array<i32>} : memref<8x8x128xf32, #tpu.memory_space<vmem>>, vector<1x8x128xf32>,
    %c2_i32 = arith.constant 2 : i32
    %c0_31 = arith.constant 0 : index
    %c0_32 = arith.constant 0 : index
    %47 = vector.load %arg7[%c0_31, %c0_32] : memref<128x128xf32, #tpu.memory_space<vmem>>, vector<128x128xf32>
    %cst_33 = arith.constant dense<0.000000e+00> : vector<8x128xf32>
    %48 = tpu.matmul %42, %47, %cst_33 {dimension_numbers = #tpu.dot_dimension_numbers<[1], [0], [0], [1], [0, 0, 1, 1], [], []>} : vector<8x128xf32>, vector<128x128xf32>, vector<8x128xf32> -> vector<8x128xf32>
    %49 = arith.index_cast %c2_i32 : i32 to index
    %c0_34 = arith.constant 0 : index
    %c0_35 = arith.constant 0 : index
    %50 = vector.load %arg13[%49, %c0_34, %c0_35] : memref<8x8x128xf32, #tpu.memory_space<vmem>>, vector<1x8x128xf32>
    %51 = vector.shape_cast %50 : vector<1x8x128xf32> to vector<8x128xf32>
    %52 = arith.addf %48, %51 : vector<8x128xf32>
    %53 = math.tanh %52 : vector<8x128xf32>
    %54 = arith.index_cast %c2_i32 : i32 to index
    %c0_36 = arith.constant 0 : index
    %c0_37 = arith.constant 0 : index
    %55 = vector.load %arg2[%54, %c0_36, %c0_37] : memref<8x8x1xf32, #tpu.memory_space<vmem>>, vector<1x8x1xf32>
    %56 = vector.shape_cast %55 : vector<1x8x1xf32> to vector<8x1xf32>
    %57 = vector.broadcast %56 : vector<8x1xf32> to vector<8x128xf32>
    %58 = arith.mulf %57, %53 : vector<8x128xf32>
    %59 = arith.addf %42, %58 : vector<8x128xf32>
    %60 = arith.index_cast %c2_i32 : i32 to index
    %c0_38 = arith.constant 0 : index
    %c0_39 = arith.constant 0 : index
    %61 = vector.load %arg13[%60, %c0_38, %c0_39] : memref<8x8x128xf32, #tpu.memory_space<vmem>>, vector<1x8x128xf32>
    %62 = vector.shape_cast %61 : vector<1x8x128xf32> to vector<8x128xf32>
    %63 = vector.shape_cast %59 : vector<8x128xf32> to vector<1x8x128xf32>
    tpu.vector_store %arg13[%60, %c0_38, %c0_39], %63 {strides = array<i32>} : memref<8x8x128xf32, #tpu.memory_space<vmem>>, vector<1x8x128xf32>,
    %c3_i32 = arith.constant 3 : i32
    %c0_40 = arith.constant 0 : index
    %c0_41 = arith.constant 0 : index
    %64 = vector.load %arg7[%c0_40, %c0_41] : memref<128x128xf32, #tpu.memory_space<vmem>>, vector<128x128xf32>
    %cst_42 = arith.constant dense<0.000000e+00> : vector<8x128xf32>
    %65 = tpu.matmul %59, %64, %cst_42 {dimension_numbers = #tpu.dot_dimension_numbers<[1], [0], [0], [1], [0, 0, 1, 1], [], []>} : vector<8x128xf32>, vector<128x128xf32>, vector<8x128xf32> -> vector<8x128xf32>
    %66 = arith.index_cast %c3_i32 : i32 to index
    %c0_43 = arith.constant 0 : index
    %c0_44 = arith.constant 0 : index
    %67 = vector.load %arg13[%66, %c0_43, %c0_44] : memref<8x8x128xf32, #tpu.memory_space<vmem>>, vector<1x8x128xf32>
    %68 = vector.shape_cast %67 : vector<1x8x128xf32> to vector<8x128xf32>
    %69 = arith.addf %65, %68 : vector<8x128xf32>
    %70 = math.tanh %69 : vector<8x128xf32>
    %71 = arith.index_cast %c3_i32 : i32 to index
    %c0_45 = arith.constant 0 : index
    %c0_46 = arith.constant 0 : index
    %72 = vector.load %arg2[%71, %c0_45, %c0_46] : memref<8x8x1xf32, #tpu.memory_space<vmem>>, vector<1x8x1xf32>
    %73 = vector.shape_cast %72 : vector<1x8x1xf32> to vector<8x1xf32>
    %74 = vector.broadcast %73 : vector<8x1xf32> to vector<8x128xf32>
    %75 = arith.mulf %74, %70 : vector<8x128xf32>
    %76 = arith.addf %59, %75 : vector<8x128xf32>
    %77 = arith.index_cast %c3_i32 : i32 to index
    %c0_47 = arith.constant 0 : index
    %c0_48 = arith.constant 0 : index
    %78 = vector.load %arg13[%77, %c0_47, %c0_48] : memref<8x8x128xf32, #tpu.memory_space<vmem>>, vector<1x8x128xf32>
    %79 = vector.shape_cast %78 : vector<1x8x128xf32> to vector<8x128xf32>
    %80 = vector.shape_cast %76 : vector<8x128xf32> to vector<1x8x128xf32>
    tpu.vector_store %arg13[%77, %c0_47, %c0_48], %80 {strides = array<i32>} : memref<8x8x128xf32, #tpu.memory_space<vmem>>, vector<1x8x128xf32>,
    %c4_i32 = arith.constant 4 : i32
    %c0_49 = arith.constant 0 : index
    %c0_50 = arith.constant 0 : index
    %81 = vector.load %arg7[%c0_49, %c0_50] : memref<128x128xf32, #tpu.memory_space<vmem>>, vector<128x128xf32>
    %cst_51 = arith.constant dense<0.000000e+00> : vector<8x128xf32>
    %82 = tpu.matmul %76, %81, %cst_51 {dimension_numbers = #tpu.dot_dimension_numbers<[1], [0], [0], [1], [0, 0, 1, 1], [], []>} : vector<8x128xf32>, vector<128x128xf32>, vector<8x128xf32> -> vector<8x128xf32>
    %83 = arith.index_cast %c4_i32 : i32 to index
    %c0_52 = arith.constant 0 : index
    %c0_53 = arith.constant 0 : index
    %84 = vector.load %arg13[%83, %c0_52, %c0_53] : memref<8x8x128xf32, #tpu.memory_space<vmem>>, vector<1x8x128xf32>
    %85 = vector.shape_cast %84 : vector<1x8x128xf32> to vector<8x128xf32>
    %86 = arith.addf %82, %85 : vector<8x128xf32>
    %87 = math.tanh %86 : vector<8x128xf32>
    %88 = arith.index_cast %c4_i32 : i32 to index
    %c0_54 = arith.constant 0 : index
    %c0_55 = arith.constant 0 : index
    %89 = vector.load %arg2[%88, %c0_54, %c0_55] : memref<8x8x1xf32, #tpu.memory_space<vmem>>, vector<1x8x1xf32>
    %90 = vector.shape_cast %89 : vector<1x8x1xf32> to vector<8x1xf32>
    %91 = vector.broadcast %90 : vector<8x1xf32> to vector<8x128xf32>
    %92 = arith.mulf %91, %87 : vector<8x128xf32>
    %93 = arith.addf %76, %92 : vector<8x128xf32>
    %94 = arith.index_cast %c4_i32 : i32 to index
    %c0_56 = arith.constant 0 : index
    %c0_57 = arith.constant 0 : index
    %95 = vector.load %arg13[%94, %c0_56, %c0_57] : memref<8x8x128xf32, #tpu.memory_space<vmem>>, vector<1x8x128xf32>
    %96 = vector.shape_cast %95 : vector<1x8x128xf32> to vector<8x128xf32>
    %97 = vector.shape_cast %93 : vector<8x128xf32> to vector<1x8x128xf32>
    tpu.vector_store %arg13[%94, %c0_56, %c0_57], %97 {strides = array<i32>} : memref<8x8x128xf32, #tpu.memory_space<vmem>>, vector<1x8x128xf32>,
    %c5_i32 = arith.constant 5 : i32
    %c0_58 = arith.constant 0 : index
    %c0_59 = arith.constant 0 : index
    %98 = vector.load %arg7[%c0_58, %c0_59] : memref<128x128xf32, #tpu.memory_space<vmem>>, vector<128x128xf32>
    %cst_60 = arith.constant dense<0.000000e+00> : vector<8x128xf32>
    %99 = tpu.matmul %93, %98, %cst_60 {dimension_numbers = #tpu.dot_dimension_numbers<[1], [0], [0], [1], [0, 0, 1, 1], [], []>} : vector<8x128xf32>, vector<128x128xf32>, vector<8x128xf32> -> vector<8x128xf32>
    %100 = arith.index_cast %c5_i32 : i32 to index
    %c0_61 = arith.constant 0 : index
    %c0_62 = arith.constant 0 : index
    %101 = vector.load %arg13[%100, %c0_61, %c0_62] : memref<8x8x128xf32, #tpu.memory_space<vmem>>, vector<1x8x128xf32>
    %102 = vector.shape_cast %101 : vector<1x8x128xf32> to vector<8x128xf32>
    %103 = arith.addf %99, %102 : vector<8x128xf32>
    %104 = math.tanh %103 : vector<8x128xf32>
    %105 = arith.index_cast %c5_i32 : i32 to index
    %c0_63 = arith.constant 0 : index
    %c0_64 = arith.constant 0 : index
    %106 = vector.load %arg2[%105, %c0_63, %c0_64] : memref<8x8x1xf32, #tpu.memory_space<vmem>>, vector<1x8x1xf32>
    %107 = vector.shape_cast %106 : vector<1x8x1xf32> to vector<8x1xf32>
    %108 = vector.broadcast %107 : vector<8x1xf32> to vector<8x128xf32>
    %109 = arith.mulf %108, %104 : vector<8x128xf32>
    %110 = arith.addf %93, %109 : vector<8x128xf32>
    %111 = arith.index_cast %c5_i32 : i32 to index
    %c0_65 = arith.constant 0 : index
    %c0_66 = arith.constant 0 : index
    %112 = vector.load %arg13[%111, %c0_65, %c0_66] : memref<8x8x128xf32, #tpu.memory_space<vmem>>, vector<1x8x128xf32>
    %113 = vector.shape_cast %112 : vector<1x8x128xf32> to vector<8x128xf32>
    %114 = vector.shape_cast %110 : vector<8x128xf32> to vector<1x8x128xf32>
    tpu.vector_store %arg13[%111, %c0_65, %c0_66], %114 {strides = array<i32>} : memref<8x8x128xf32, #tpu.memory_space<vmem>>, vector<1x8x128xf32>,
    %c6_i32 = arith.constant 6 : i32
    %c0_67 = arith.constant 0 : index
    %c0_68 = arith.constant 0 : index
    %115 = vector.load %arg7[%c0_67, %c0_68] : memref<128x128xf32, #tpu.memory_space<vmem>>, vector<128x128xf32>
    %cst_69 = arith.constant dense<0.000000e+00> : vector<8x128xf32>
    %116 = tpu.matmul %110, %115, %cst_69 {dimension_numbers = #tpu.dot_dimension_numbers<[1], [0], [0], [1], [0, 0, 1, 1], [], []>} : vector<8x128xf32>, vector<128x128xf32>, vector<8x128xf32> -> vector<8x128xf32>
    %117 = arith.index_cast %c6_i32 : i32 to index
    %c0_70 = arith.constant 0 : index
    %c0_71 = arith.constant 0 : index
    %118 = vector.load %arg13[%117, %c0_70, %c0_71] : memref<8x8x128xf32, #tpu.memory_space<vmem>>, vector<1x8x128xf32>
    %119 = vector.shape_cast %118 : vector<1x8x128xf32> to vector<8x128xf32>
    %120 = arith.addf %116, %119 : vector<8x128xf32>
    %121 = math.tanh %120 : vector<8x128xf32>
    %122 = arith.index_cast %c6_i32 : i32 to index
    %c0_72 = arith.constant 0 : index
    %c0_73 = arith.constant 0 : index
    %123 = vector.load %arg2[%122, %c0_72, %c0_73] : memref<8x8x1xf32, #tpu.memory_space<vmem>>, vector<1x8x1xf32>
    %124 = vector.shape_cast %123 : vector<1x8x1xf32> to vector<8x1xf32>
    %125 = vector.broadcast %124 : vector<8x1xf32> to vector<8x128xf32>
    %126 = arith.mulf %125, %121 : vector<8x128xf32>
    %127 = arith.addf %110, %126 : vector<8x128xf32>
    %128 = arith.index_cast %c6_i32 : i32 to index
    %c0_74 = arith.constant 0 : index
    %c0_75 = arith.constant 0 : index
    %129 = vector.load %arg13[%128, %c0_74, %c0_75] : memref<8x8x128xf32, #tpu.memory_space<vmem>>, vector<1x8x128xf32>
    %130 = vector.shape_cast %129 : vector<1x8x128xf32> to vector<8x128xf32>
    %131 = vector.shape_cast %127 : vector<8x128xf32> to vector<1x8x128xf32>
    tpu.vector_store %arg13[%128, %c0_74, %c0_75], %131 {strides = array<i32>} : memref<8x8x128xf32, #tpu.memory_space<vmem>>, vector<1x8x128xf32>,
    %c7_i32 = arith.constant 7 : i32
    %c0_76 = arith.constant 0 : index
    %c0_77 = arith.constant 0 : index
    %132 = vector.load %arg7[%c0_76, %c0_77] : memref<128x128xf32, #tpu.memory_space<vmem>>, vector<128x128xf32>
    %cst_78 = arith.constant dense<0.000000e+00> : vector<8x128xf32>
    %133 = tpu.matmul %127, %132, %cst_78 {dimension_numbers = #tpu.dot_dimension_numbers<[1], [0], [0], [1], [0, 0, 1, 1], [], []>} : vector<8x128xf32>, vector<128x128xf32>, vector<8x128xf32> -> vector<8x128xf32>
    %134 = arith.index_cast %c7_i32 : i32 to index
    %c0_79 = arith.constant 0 : index
    %c0_80 = arith.constant 0 : index
    %135 = vector.load %arg13[%134, %c0_79, %c0_80] : memref<8x8x128xf32, #tpu.memory_space<vmem>>, vector<1x8x128xf32>
    %136 = vector.shape_cast %135 : vector<1x8x128xf32> to vector<8x128xf32>
    %137 = arith.addf %133, %136 : vector<8x128xf32>
    %138 = math.tanh %137 : vector<8x128xf32>
    %139 = arith.index_cast %c7_i32 : i32 to index
    %c0_81 = arith.constant 0 : index
    %c0_82 = arith.constant 0 : index
    %140 = vector.load %arg2[%139, %c0_81, %c0_82] : memref<8x8x1xf32, #tpu.memory_space<vmem>>, vector<1x8x1xf32>
    %141 = vector.shape_cast %140 : vector<1x8x1xf32> to vector<8x1xf32>
    %142 = vector.broadcast %141 : vector<8x1xf32> to vector<8x128xf32>
    %143 = arith.mulf %142, %138 : vector<8x128xf32>
    %144 = arith.addf %127, %143 : vector<8x128xf32>
    %145 = arith.index_cast %c7_i32 : i32 to index
    %c0_83 = arith.constant 0 : index
    %c0_84 = arith.constant 0 : index
    %146 = vector.load %arg13[%145, %c0_83, %c0_84] : memref<8x8x128xf32, #tpu.memory_space<vmem>>, vector<1x8x128xf32>
    %147 = vector.shape_cast %146 : vector<1x8x128xf32> to vector<8x128xf32>
    %148 = vector.shape_cast %144 : vector<8x128xf32> to vector<1x8x128xf32>
    tpu.vector_store %arg13[%145, %c0_83, %c0_84], %148 {strides = array<i32>} : memref<8x8x128xf32, #tpu.memory_space<vmem>>, vector<1x8x128xf32>,
    %c8_i32 = arith.constant 8 : i32
    %c0_85 = arith.constant 0 : index
    %c0_86 = arith.constant 0 : index
    %149 = vector.load %arg14[%c0_85, %c0_86] : memref<8x128xf32, #tpu.memory_space<vmem>>, vector<8x128xf32>
    tpu.vector_store %arg14[%c0_85, %c0_86], %144 {strides = array<i32>} : memref<8x128xf32, #tpu.memory_space<vmem>>, vector<8x128xf32>,
    %c0_87 = arith.constant 0 : index
    %c0_88 = arith.constant 0 : index
    %c0_89 = arith.constant 0 : index
    %150 = vector.load %arg13[%c0_87, %c0_88, %c0_89] : memref<8x8x128xf32, #tpu.memory_space<vmem>>, vector<8x8x128xf32>
    %151 = vector.shape_cast %150 : vector<8x8x128xf32> to vector<64x128xf32>
    %c0_90 = arith.constant 0 : index
    %c0_91 = arith.constant 0 : index
    %152 = vector.load %arg10[%c0_90, %c0_91] : memref<128x128xf32, #tpu.memory_space<vmem>>, vector<128x128xf32>
    %cst_92 = arith.constant dense<0.000000e+00> : vector<64x128xf32>
    %153 = tpu.matmul %151, %152, %cst_92 {dimension_numbers = #tpu.dot_dimension_numbers<[1], [0], [0], [1], [0, 0, 1, 1], [], []>} : vector<64x128xf32>, vector<128x128xf32>, vector<64x128xf32> -> vector<64x128xf32>
    %c0_93 = arith.constant 0 : index
    %c0_94 = arith.constant 0 : index
    %154 = vector.load %arg11[%c0_93, %c0_94] : memref<1x128xf32, #tpu.memory_space<vmem>>, vector<1x128xf32>
    %155 = vector.broadcast %154 : vector<1x128xf32> to vector<64x128xf32>
    %156 = arith.addf %153, %155 : vector<64x128xf32>
    %157 = vector.shape_cast %156 : vector<64x128xf32> to vector<8x8x128xf32>
    %c0_95 = arith.constant 0 : index
    %c0_96 = arith.constant 0 : index
    %c0_97 = arith.constant 0 : index
    %158 = vector.load %arg12[%c0_95, %c0_96, %c0_97] : memref<8x8x128xf32, #tpu.memory_space<vmem>>, vector<8x8x128xf32>
    tpu.vector_store %arg12[%c0_95, %c0_96, %c0_97], %157 {strides = array<i32>} : memref<8x8x128xf32, #tpu.memory_space<vmem>>, vector<8x8x128xf32>,
    return
  }
  func.func @transform_0(%arg0: i32, %arg1: i32) -> (i32, i32, i32) {
    %c0_i32 = arith.constant 0 : i32
    %c0_i32_0 = arith.constant 0 : i32
    return %arg1, %arg0, %c0_i32 : i32, i32, i32
  }
  func.func @transform_1(%arg0: i32, %arg1: i32) -> (i32, i32, i32) {
    %c0_i32 = arith.constant 0 : i32
    %c0_i32_0 = arith.constant 0 : i32
    return %arg1, %arg0, %c0_i32 : i32, i32, i32
  }
  func.func @transform_2(%arg0: i32, %arg1: i32) -> (i32, i32) {
    %c0_i32 = arith.constant 0 : i32
    %c0_i32_0 = arith.constant 0 : i32
    return %arg0, %c0_i32 : i32, i32
  }
  func.func @transform_3(%arg0: i32, %arg1: i32) -> (i32, i32) {
    %c0_i32 = arith.constant 0 : i32
    %c0_i32_0 = arith.constant 0 : i32
    %c0_i32_1 = arith.constant 0 : i32
    return %c0_i32, %c0_i32_0 : i32, i32
  }
  func.func @transform_4(%arg0: i32, %arg1: i32) -> (i32, i32) {
    %c0_i32 = arith.constant 0 : i32
    %c0_i32_0 = arith.constant 0 : i32
    %c0_i32_1 = arith.constant 0 : i32
    return %c0_i32, %c0_i32_0 : i32, i32
  }
  func.func @transform_5(%arg0: i32, %arg1: i32) -> (i32, i32) {
    %c0_i32 = arith.constant 0 : i32
    %c0_i32_0 = arith.constant 0 : i32
    %c0_i32_1 = arith.constant 0 : i32
    return %c0_i32, %c0_i32_0 : i32, i32
  }
  func.func @transform_6(%arg0: i32, %arg1: i32) -> (i32, i32) {
    %c0_i32 = arith.constant 0 : i32
    %c0_i32_0 = arith.constant 0 : i32
    %c0_i32_1 = arith.constant 0 : i32
    return %c0_i32, %c0_i32_0 : i32, i32
  }
  func.func @transform_7(%arg0: i32, %arg1: i32) -> (i32, i32) {
    %c0_i32 = arith.constant 0 : i32
    %c0_i32_0 = arith.constant 0 : i32
    %c0_i32_1 = arith.constant 0 : i32
    return %c0_i32, %c0_i32_0 : i32, i32
  }
  func.func @transform_8(%arg0: i32, %arg1: i32) -> (i32, i32) {
    %c0_i32 = arith.constant 0 : i32
    %c0_i32_0 = arith.constant 0 : i32
    %c0_i32_1 = arith.constant 0 : i32
    return %c0_i32, %c0_i32_0 : i32, i32
  }
  func.func @transform_9(%arg0: i32, %arg1: i32) -> (i32, i32) {
    %c0_i32 = arith.constant 0 : i32
    %c0_i32_0 = arith.constant 0 : i32
    %c0_i32_1 = arith.constant 0 : i32
    return %c0_i32, %c0_i32_0 : i32, i32
  }
  func.func @transform_10(%arg0: i32, %arg1: i32) -> (i32, i32, i32) {
    %c0_i32 = arith.constant 0 : i32
    %c0_i32_0 = arith.constant 0 : i32
    return %arg1, %arg0, %c0_i32 : i32, i32, i32
  }
  func.func @transform_11(%arg0: i32, %arg1: i32) -> (i32, i32, i32) {
    %c0_i32 = arith.constant 0 : i32
    %c0_i32_0 = arith.constant 0 : i32
    return %arg1, %arg0, %c0_i32 : i32, i32, i32
  }
}

</mosaic_0001>

<llo_original>
// kernel: sub.1
$region0: #{sub.1}
  #allocation0 [shape = 's32[1]{0}', space=sflag, size = 0x4, scoped, tag = 'scoped memory for sub.1']
  %s0 = inlined_call_operand.vmem [shape: f32[2,7], index: 0, kind: input, shape index: {}]
  %s1 = inlined_call_operand.vmem [shape: f32[2,7], index: 1, kind: input, shape index: {}]
  %s2 = inlined_call_operand.vmem [shape: f32[2,7], index: 2, kind: output, shape index: {}]
  %v3 = vld [vmem:[%s0] sm:$0x7f]
  %v4 = vld [vmem:[%s1] sm:$0x7f]
  %5 = xla_tuple %v3, %v4
  %6 = xla_tuple %5
  %v7 = vsub.f32 %v3, %v4
  %8 = xla_tuple %v7
  %9 = vst [vmem:[%s2] sm:$0xff] %v7

// kernel: ivp_forward.1
$region0: #{ivp_forward.1}
  #allocation0 [shape = 'u32[]', space=smem, size = 0x4, offset = 0x4, fixed_abs, tag = 'smem constant byte address 0x4 - core index']
  #allocation1 [shape = 'u32[144,128]{1,0:T(1,128)}', space=vmem, size = 0x12000, scoped, tag = 'internal scratch']
  #allocation2 [shape = 'f32[8,128]{1,0:T(8,128)}', space=vmem, size = 0x1000, scoped, tag = 'scratch operand']
  %s0 = inlined_call_operand.vmem [shape: f32[8,8,1], index: 0, kind: input, shape index: {}]
  %s1 = inlined_call_operand.vmem [shape: f32[8,8,4], index: 1, kind: input, shape index: {}]
  %s2 = inlined_call_operand.vmem [shape: f32[8,3], index: 2, kind: input, shape index: {}]
  %s3 = inlined_call_operand.vmem [shape: f32[3,128], index: 3, kind: input, shape index: {}]
  %s4 = inlined_call_operand.vmem [shape: f32[1,128], index: 4, kind: input, shape index: {}]
  %s5 = inlined_call_operand.vmem [shape: f32[128,128], index: 5, kind: input, shape index: {}]
  %s6 = inlined_call_operand.vmem [shape: f32[4,128], index: 6, kind: input, shape index: {}]
  %s7 = inlined_call_operand.vmem [shape: f32[1,128], index: 7, kind: input, shape index: {}]
  %s8 = inlined_call_operand.vmem [shape: f32[128,128], index: 8, kind: input, shape index: {}]
  %s9 = inlined_call_operand.vmem [shape: f32[1,128], index: 9, kind: input, shape index: {}]
  %s10 = inlined_call_operand.vmem [shape: f32[8,8,128], index: 10, kind: output, shape index: {0}]
  %s11 = inlined_call_operand.vmem [shape: f32[8,8,128], index: 11, kind: output, shape index: {1}]
  %12 = xla_tuple %s10, %s11
  %s13 = sld [smem:[#allocation0]]
  $region62: #{ivp_forward.1} parent=0
    _
  %s15 = ssub.s32 1, %s13
  %s16 = scalar_select 0, %s15, %s13
  // Predicated region
  $region2: #{ivp_forward.1} parent=0 // pred_check
    _
  $region3: #{ivp_forward.1} parent=0 // pred_check_branch
    %18 = sbr.rel (0) target = $region5
  $region4: #{ivp_forward.1} parent=0 // pred_region
    _
  $region5: #{ivp_forward.1} parent=0 // pred_fallthru
    _
  // Predicated region
  $region6: #{ivp_forward.1} parent=0 // pred_check
    _
  $region7: #{ivp_forward.1} parent=0 // pred_check_branch
    %20 = sbr.rel (0) target = $region9
  $region8: #{ivp_forward.1} parent=0 // pred_region
    _
  $region9: #{ivp_forward.1} parent=0 // pred_fallthru
    _
  // Predicated region
  $region10: #{ivp_forward.1} parent=0 // pred_check
    _
  $region11: #{ivp_forward.1} parent=0 // pred_check_branch
    %22 = sbr.rel (0) target = $region13
  $region12: #{ivp_forward.1} parent=0 // pred_region
    _
  $region13: #{ivp_forward.1} parent=0 // pred_fallthru
    _
  // Predicated region
  $region14: #{ivp_forward.1} parent=0 // pred_check
    _
  $region15: #{ivp_forward.1} parent=0 // pred_check_branch
    %24 = sbr.rel (0) target = $region17
  $region16: #{ivp_forward.1} parent=0 // pred_region
    _
  $region17: #{ivp_forward.1} parent=0 // pred_fallthru
    _
  // Predicated region
  $region18: #{ivp_forward.1} parent=0 // pred_check
    _
  $region19: #{ivp_forward.1} parent=0 // pred_check_branch
    %26 = sbr.rel (0) target = $region21
  $region20: #{ivp_forward.1} parent=0 // pred_region
    _
  $region21: #{ivp_forward.1} parent=0 // pred_fallthru
    _
  // Predicated region
  $region22: #{ivp_forward.1} parent=0 // pred_check
    _
  $region23: #{ivp_forward.1} parent=0 // pred_check_branch
    %28 = sbr.rel (0) target = $region25
  $region24: #{ivp_forward.1} parent=0 // pred_region
    _
  $region25: #{ivp_forward.1} parent=0 // pred_fallthru
    _
  // Predicated region
  $region26: #{ivp_forward.1} parent=0 // pred_check
    _
  $region27: #{ivp_forward.1} parent=0 // pred_check_branch
    %30 = sbr.rel (0) target = $region29
  $region28: #{ivp_forward.1} parent=0 // pred_region
    _
  $region29: #{ivp_forward.1} parent=0 // pred_fallthru
    _
  // Predicated region
  $region30: #{ivp_forward.1} parent=0 // pred_check
    _
  $region31: #{ivp_forward.1} parent=0 // pred_check_branch
    %32 = sbr.rel (0) target = $region33
  $region32: #{ivp_forward.1} parent=0 // pred_region
    _
  $region33: #{ivp_forward.1} parent=0 // pred_fallthru
    _
  // Predicated region
  $region34: #{ivp_forward.1} parent=0 // pred_check
    _
  $region35: #{ivp_forward.1} parent=0 // pred_check_branch
    %34 = sbr.rel (0) target = $region37
  $region36: #{ivp_forward.1} parent=0 // pred_region
    _
  $region37: #{ivp_forward.1} parent=0 // pred_fallthru
    _
  // Predicated region
  $region38: #{ivp_forward.1} parent=0 // pred_check
    _
  $region39: #{ivp_forward.1} parent=0 // pred_check_branch
    %36 = sbr.rel (0) target = $region41
  $region40: #{ivp_forward.1} parent=0 // pred_region
    _
  $region41: #{ivp_forward.1} parent=0 // pred_fallthru
    _
  %p37 = scmp.eq.s32.totalorder 0, 0
  // Predicated region
  $region42: #{ivp_forward.1} parent=0 // pred_check
    %p38 = pneg %p37
  $region43: #{ivp_forward.1} parent=0 // pred_check_branch
    %40 = sbr.rel (%p38) target = $region45
  $region44: #{ivp_forward.1} parent=0 // pred_region
    %v41 = vld [vmem:[%s2] sm:$0xff]
    %v42 = vld [vmem:[%s3] sm:$0x7]
    %v43 = vld [vmem:[%s4] sm:$0x1]
    %v45 = vlaneseq
    %v46 = vshrl.u32 %v45, 7
    %v47 = vsub.s32 0, %v46
    %v48 = vrot.slane %v43, %v47
    %vm50 = vcmask 23552
    %v52 = vsel %vm50, %v41, 0
    %vm54 = vcmask 1042432
    %v56 = vsel %vm54, %v42, 0
    %58 = vmatprep.subr.mxu0 0.0
    %59 = vmatpush1.msra.mxu0 0.0
    %60 = vmatprep.subr.mxu0 0.0
    %61 = vmatpush1.msra.mxu0 0.0
    %62 = vmatprep.subr.mxu0 0.0
    %63 = vmatpush1.msra.mxu0 0.0
    %64 = vmatprep.subr.mxu0 0.0
    %65 = vmatpush1.msra.mxu0 0.0
    %66 = vmatprep.subr.mxu0 0.0
    %67 = vmatpush1.msra.mxu0 0.0
    %68 = vmatprep.subr.mxu0 0.0
    %69 = vmatpush1.msra.mxu0 0.0
    %70 = vmatprep.subr.mxu0 0.0
    %71 = vmatpush1.msra.mxu0 0.0
    %72 = vmatprep.subr.mxu0 0.0
    %73 = vmatpush1.msra.mxu0 0.0
    %74 = vmatprep.subr.mxu0 0.0
    %75 = vmatpush1.msra.mxu0 0.0
    %76 = vmatprep.subr.mxu0 0.0
    %77 = vmatpush1.msra.mxu0 0.0
    %78 = vmatprep.subr.mxu0 0.0
    %79 = vmatpush1.msra.mxu0 0.0
    %80 = vmatprep.subr.mxu0 0.0
    %81 = vmatpush1.msra.mxu0 0.0
    %82 = vmatprep.subr.mxu0 0.0
    %83 = vmatpush1.msra.mxu0 0.0
    %84 = vmatprep.subr.mxu0 0.0
    %85 = vmatpush1.msra.mxu0 0.0
    %86 = vmatprep.subr.mxu0 0.0
    %87 = vmatpush1.msra.mxu0 0.0
    %88 = vmatprep.subr.mxu0 0.0
    %89 = vmatpush1.msra.mxu0 %v56
    %90 = vmatprep.subr.mxu0 0.0
    %91 = vmatpush2.msra.mxu0 0.0
    %92 = vmatprep.subr.mxu0 0.0
    %93 = vmatpush2.msra.mxu0 0.0
    %94 = vmatprep.subr.mxu0 0.0
    %95 = vmatpush2.msra.mxu0 0.0
    %96 = vmatprep.subr.mxu0 0.0
    %97 = vmatpush2.msra.mxu0 0.0
    %98 = vmatprep.subr.mxu0 0.0
    %99 = vmatpush2.msra.mxu0 0.0
    %100 = vmatprep.subr.mxu0 0.0
    %101 = vmatpush2.msra.mxu0 0.0
    %102 = vmatprep.subr.mxu0 0.0
    %103 = vmatpush2.msra.mxu0 0.0
    %104 = vmatprep.subr.mxu0 0.0
    %105 = vmatpush2.msra.mxu0 0.0
    %106 = vmatprep.subr.mxu0 0.0
    %107 = vmatpush2.msra.mxu0 0.0
    %108 = vmatprep.subr.mxu0 0.0
    %109 = vmatpush2.msra.mxu0 0.0
    %110 = vmatprep.subr.mxu0 0.0
    %111 = vmatpush2.msra.mxu0 0.0
    %112 = vmatprep.subr.mxu0 0.0
    %113 = vmatpush2.msra.mxu0 0.0
    %114 = vmatprep.subr.mxu0 0.0
    %115 = vmatpush2.msra.mxu0 0.0
    %116 = vmatprep.subr.mxu0 0.0
    %117 = vmatpush2.msra.mxu0 0.0
    %118 = vmatprep.subr.mxu0 0.0
    %119 = vmatpush2.msra.mxu0 0.0
    %120 = vmatprep.subr.mxu0 0.0
    %121 = vmatpush2.msra.mxu0 0.0
    %122 = vmatprep.mubr.f32.mxu0 0.0
    %123 = vmatmul.mubr.f32.gmra.mxu0 %v52
    %v124 = vpop.f32.mrf.mxu0
    %v125 = vadd.f32 %v48, %v124
    %v126 = vpop.f32.mrf.mxu0
    %127 = vdwg.mxu0
    %128 = vst [vmem:[#allocation2] sm:$0xff] %v125
  $region45: #{ivp_forward.1} parent=0 // pred_fallthru
    _
  %v129 = vld [vmem:[%s1] sm:$0xff]
  %v130 = vld [vmem:[%s1 + $0x8] sm:$0xff]
  %v131 = vld [vmem:[%s1 + $0x10] sm:$0xff]
  %v132 = vld [vmem:[%s1 + $0x18] sm:$0xff]
  %v133 = vld [vmem:[%s1 + $0x20] sm:$0xff]
  %v134 = vld [vmem:[%s1 + $0x28] sm:$0xff]
  %v135 = vld [vmem:[%s1 + $0x30] sm:$0xff]
  %v136 = vld [vmem:[%s1 + $0x38] sm:$0xff]
  %v137 = vld [vmem:[%s6] sm:$0xf]
  %v138 = vld [vmem:[%s7] sm:$0x1]
  %v140 = vlaneseq
  %v141 = vshrl.u32 %v140, 7
  %v142 = vsub.s32 0, %v141
  %v143 = vrot.slane %v138, %v142
  %vm145 = vcmask 31744
  %v147 = vsel %vm145, %v129, 0
  %v150 = vsel %vm145, %v130, 0
  %v153 = vsel %vm145, %v131, 0
  %v156 = vsel %vm145, %v132, 0
  %v159 = vsel %vm145, %v133, 0
  %v162 = vsel %vm145, %v134, 0
  %v165 = vsel %vm145, %v135, 0
  %v168 = vsel %vm145, %v136, 0
  %vm170 = vcmask 1043456
  %v172 = vsel %vm170, %v137, 0
  %174 = vmatprep.subr.mxu0 0.0
  %175 = vmatpush1.msra.mxu0 0.0
  %176 = vmatprep.subr.mxu0 0.0
  %177 = vmatpush1.msra.mxu0 0.0
  %178 = vmatprep.subr.mxu0 0.0
  %179 = vmatpush1.msra.mxu0 0.0
  %180 = vmatprep.subr.mxu0 0.0
  %181 = vmatpush1.msra.mxu0 0.0
  %182 = vmatprep.subr.mxu0 0.0
  %183 = vmatpush1.msra.mxu0 0.0
  %184 = vmatprep.subr.mxu0 0.0
  %185 = vmatpush1.msra.mxu0 0.0
  %186 = vmatprep.subr.mxu0 0.0
  %187 = vmatpush1.msra.mxu0 0.0
  %188 = vmatprep.subr.mxu0 0.0
  %189 = vmatpush1.msra.mxu0 0.0
  %190 = vmatprep.subr.mxu0 0.0
  %191 = vmatpush1.msra.mxu0 0.0
  %192 = vmatprep.subr.mxu0 0.0
  %193 = vmatpush1.msra.mxu0 0.0
  %194 = vmatprep.subr.mxu0 0.0
  %195 = vmatpush1.msra.mxu0 0.0
  %196 = vmatprep.subr.mxu0 0.0
  %197 = vmatpush1.msra.mxu0 0.0
  %198 = vmatprep.subr.mxu0 0.0
  %199 = vmatpush1.msra.mxu0 0.0
  %200 = vmatprep.subr.mxu0 0.0
  %201 = vmatpush1.msra.mxu0 0.0
  %202 = vmatprep.subr.mxu0 0.0
  %203 = vmatpush1.msra.mxu0 0.0
  %204 = vmatprep.subr.mxu0 0.0
  %205 = vmatpush1.msra.mxu0 %v172
  %206 = vmatprep.subr.mxu0 0.0
  %207 = vmatpush2.msra.mxu0 0.0
  %208 = vmatprep.subr.mxu0 0.0
  %209 = vmatpush2.msra.mxu0 0.0
  %210 = vmatprep.subr.mxu0 0.0
  %211 = vmatpush2.msra.mxu0 0.0
  %212 = vmatprep.subr.mxu0 0.0
  %213 = vmatpush2.msra.mxu0 0.0
  %214 = vmatprep.subr.mxu0 0.0
  %215 = vmatpush2.msra.mxu0 0.0
  %216 = vmatprep.subr.mxu0 0.0
  %217 = vmatpush2.msra.mxu0 0.0
  %218 = vmatprep.subr.mxu0 0.0
  %219 = vmatpush2.msra.mxu0 0.0
  %220 = vmatprep.subr.mxu0 0.0
  %221 = vmatpush2.msra.mxu0 0.0
  %222 = vmatprep.subr.mxu0 0.0
  %223 = vmatpush2.msra.mxu0 0.0
  %224 = vmatprep.subr.mxu0 0.0
  %225 = vmatpush2.msra.mxu0 0.0
  %226 = vmatprep.subr.mxu0 0.0
  %227 = vmatpush2.msra.mxu0 0.0
  %228 = vmatprep.subr.mxu0 0.0
  %229 = vmatpush2.msra.mxu0 0.0
  %230 = vmatprep.subr.mxu0 0.0
  %231 = vmatpush2.msra.mxu0 0.0
  %232 = vmatprep.subr.mxu0 0.0
  %233 = vmatpush2.msra.mxu0 0.0
  %234 = vmatprep.subr.mxu0 0.0
  %235 = vmatpush2.msra.mxu0 0.0
  %236 = vmatprep.subr.mxu0 0.0
  %237 = vmatpush2.msra.mxu0 0.0
  %238 = vmatprep.mubr.f32.mxu0 0.0
  %239 = vmatmul.mubr.f32.gmra.mxu0 %v147
  %v240 = vpop.f32.mrf.mxu0
  %v241 = vadd.f32 %v143, %v240
  %v242 = vpop.f32.mrf.mxu0
  %243 = vmatprep.mubr.f32.mxu0 0.0
  %244 = vmatmul.mubr.f32.gmra.mxu0 %v150
  %v245 = vpop.f32.mrf.mxu0
  %v246 = vadd.f32 %v143, %v245
  %v247 = vpop.f32.mrf.mxu0
  %248 = vmatprep.mubr.f32.mxu0 0.0
  %249 = vmatmul.mubr.f32.gmra.mxu0 %v153
  %v250 = vpop.f32.mrf.mxu0
  %v251 = vadd.f32 %v143, %v250
  %v252 = vpop.f32.mrf.mxu0
  %253 = vmatprep.mubr.f32.mxu0 0.0
  %254 = vmatmul.mubr.f32.gmra.mxu0 %v156
  %v255 = vpop.f32.mrf.mxu0
  %v256 = vadd.f32 %v143, %v255
  %v257 = vpop.f32.mrf.mxu0
  %258 = vmatprep.mubr.f32.mxu0 0.0
  %259 = vmatmul.mubr.f32.gmra.mxu0 %v159
  %v260 = vpop.f32.mrf.mxu0
  %v261 = vadd.f32 %v143, %v260
  %v262 = vpop.f32.mrf.mxu0
  %263 = vmatprep.mubr.f32.mxu0 0.0
  %264 = vmatmul.mubr.f32.gmra.mxu0 %v162
  %v265 = vpop.f32.mrf.mxu0
  %v266 = vadd.f32 %v143, %v265
  %v267 = vpop.f32.mrf.mxu0
  %268 = vmatprep.mubr.f32.mxu0 0.0
  %269 = vmatmul.mubr.f32.gmra.mxu0 %v165
  %v270 = vpop.f32.mrf.mxu0
  %v271 = vadd.f32 %v143, %v270
  %v272 = vpop.f32.mrf.mxu0
  %273 = vmatprep.mubr.f32.mxu0 0.0
  %274 = vmatmul.mubr.f32.gmra.mxu0 %v168
  %v275 = vpop.f32.mrf.mxu0
  %v276 = vadd.f32 %v143, %v275
  %v277 = vpop.f32.mrf.mxu0
  %278 = vdwg.mxu0
  %279 = vst [vmem:[%s11] sm:$0xff] %v241
  %280 = vst [vmem:[%s11 + $0x8] sm:$0xff] %v246
  %281 = vst [vmem:[%s11 + $0x10] sm:$0xff] %v251
  %282 = vst [vmem:[%s11 + $0x18] sm:$0xff] %v256
  %283 = vst [vmem:[%s11 + $0x20] sm:$0xff] %v261
  %284 = vst [vmem:[%s11 + $0x28] sm:$0xff] %v266
  %285 = vst [vmem:[%s11 + $0x30] sm:$0xff] %v271
  %286 = vst [vmem:[%s11 + $0x38] sm:$0xff] %v276
  %v287 = vld [vmem:[#allocation2] sm:$0xff]
  %v288 = vld [vmem:[%s5] sm:$0xff]
  %v289 = vld [vmem:[%s5 + $0x8] sm:$0xff]
  %v290 = vld [vmem:[%s5 + $0x10] sm:$0xff]
  %v291 = vld [vmem:[%s5 + $0x18] sm:$0xff]
  %v292 = vld [vmem:[%s5 + $0x20] sm:$0xff]
  %v293 = vld [vmem:[%s5 + $0x28] sm:$0xff]
  %v294 = vld [vmem:[%s5 + $0x30] sm:$0xff]
  %v295 = vld [vmem:[%s5 + $0x38] sm:$0xff]
  %v296 = vld [vmem:[%s5 + $0x40] sm:$0xff]
  %v297 = vld [vmem:[%s5 + $0x48] sm:$0xff]
  %v298 = vld [vmem:[%s5 + $0x50] sm:$0xff]
  %v299 = vld [vmem:[%s5 + $0x58] sm:$0xff]
  %v300 = vld [vmem:[%s5 + $0x60] sm:$0xff]
  %v301 = vld [vmem:[%s5 + $0x68] sm:$0xff]
  %v302 = vld [vmem:[%s5 + $0x70] sm:$0xff]
  %v303 = vld [vmem:[%s5 + $0x78] sm:$0xff]
  %v304 = vld [vmem:[%s11] sm:$0xff]
  %305 = vmatprep.subr.mxu0 0.0
  %306 = vmatpush1.msra.mxu0 %v303
  %307 = vmatprep.subr.mxu0 0.0
  %308 = vmatpush1.msra.mxu0 %v302
  %309 = vmatprep.subr.mxu0 0.0
  %310 = vmatpush1.msra.mxu0 %v301
  %311 = vmatprep.subr.mxu0 0.0
  %312 = vmatpush1.msra.mxu0 %v300
  %313 = vmatprep.subr.mxu0 0.0
  %314 = vmatpush1.msra.mxu0 %v299
  %315 = vmatprep.subr.mxu0 0.0
  %316 = vmatpush1.msra.mxu0 %v298
  %317 = vmatprep.subr.mxu0 0.0
  %318 = vmatpush1.msra.mxu0 %v297
  %319 = vmatprep.subr.mxu0 0.0
  %320 = vmatpush1.msra.mxu0 %v296
  %321 = vmatprep.subr.mxu0 0.0
  %322 = vmatpush1.msra.mxu0 %v295
  %323 = vmatprep.subr.mxu0 0.0
  %324 = vmatpush1.msra.mxu0 %v294
  %325 = vmatprep.subr.mxu0 0.0
  %326 = vmatpush1.msra.mxu0 %v293
  %327 = vmatprep.subr.mxu0 0.0
  %328 = vmatpush1.msra.mxu0 %v292
  %329 = vmatprep.subr.mxu0 0.0
  %330 = vmatpush1.msra.mxu0 %v291
  %331 = vmatprep.subr.mxu0 0.0
  %332 = vmatpush1.msra.mxu0 %v290
  %333 = vmatprep.subr.mxu0 0.0
  %334 = vmatpush1.msra.mxu0 %v289
  %335 = vmatprep.subr.mxu0 0.0
  %336 = vmatpush1.msra.mxu0 %v288
  %337 = vmatprep.subr.mxu0 0.0
  %338 = vmatpush2.msra.mxu0 0.0
  %339 = vmatprep.subr.mxu0 0.0
  %340 = vmatpush2.msra.mxu0 0.0
  %341 = vmatprep.subr.mxu0 0.0
  %342 = vmatpush2.msra.mxu0 0.0
  %343 = vmatprep.subr.mxu0 0.0
  %344 = vmatpush2.msra.mxu0 0.0
  %345 = vmatprep.subr.mxu0 0.0
  %346 = vmatpush2.msra.mxu0 0.0
  %347 = vmatprep.subr.mxu0 0.0
  %348 = vmatpush2.msra.mxu0 0.0
  %349 = vmatprep.subr.mxu0 0.0
  %350 = vmatpush2.msra.mxu0 0.0
  %351 = vmatprep.subr.mxu0 0.0
  %352 = vmatpush2.msra.mxu0 0.0
  %353 = vmatprep.subr.mxu0 0.0
  %354 = vmatpush2.msra.mxu0 0.0
  %355 = vmatprep.subr.mxu0 0.0
  %356 = vmatpush2.msra.mxu0 0.0
  %357 = vmatprep.subr.mxu0 0.0
  %358 = vmatpush2.msra.mxu0 0.0
  %359 = vmatprep.subr.mxu0 0.0
  %360 = vmatpush2.msra.mxu0 0.0
  %361 = vmatprep.subr.mxu0 0.0
  %362 = vmatpush2.msra.mxu0 0.0
  %363 = vmatprep.subr.mxu0 0.0
  %364 = vmatpush2.msra.mxu0 0.0
  %365 = vmatprep.subr.mxu0 0.0
  %366 = vmatpush2.msra.mxu0 0.0
  %367 = vmatprep.subr.mxu0 0.0
  %368 = vmatpush2.msra.mxu0 0.0
  %369 = vmatprep.mubr.f32.mxu0 0.0
  %370 = vmatmul.mubr.f32.gmra.mxu0 %v287
  %v371 = vpop.f32.mrf.mxu0
  %v372 = vadd.f32 %v304, %v371
  %v373 = vpop.f32.mrf.mxu0
  %374 = vdwg.mxu0
  %v375 = vtanh.pop %v372
  %v376 = vld [vmem:[%s0] sm:$0xff]
  %378 = vset.pattern.permute.xlu0 0
  %379 = vperm.xlu0 %378, %v376
  %v380 = vpop.permute.xlu0 %379
  %v382 = vmul.f32 %v380, %v375
  %v383 = vadd.f32 %v287, %v382
  %384 = vst [vmem:[%s11] sm:$0xff] %v383
  %v385 = vld [vmem:[%s5] sm:$0xff]
  %v386 = vld [vmem:[%s5 + $0x8] sm:$0xff]
  %v387 = vld [vmem:[%s5 + $0x10] sm:$0xff]
  %v388 = vld [vmem:[%s5 + $0x18] sm:$0xff]
  %v389 = vld [vmem:[%s5 + $0x20] sm:$0xff]
  %v390 = vld [vmem:[%s5 + $0x28] sm:$0xff]
  %v391 = vld [vmem:[%s5 + $0x30] sm:$0xff]
  %v392 = vld [vmem:[%s5 + $0x38] sm:$0xff]
  %v393 = vld [vmem:[%s5 + $0x40] sm:$0xff]
  %v394 = vld [vmem:[%s5 + $0x48] sm:$0xff]
  %v395 = vld [vmem:[%s5 + $0x50] sm:$0xff]
  %v396 = vld [vmem:[%s5 + $0x58] sm:$0xff]
  %v397 = vld [vmem:[%s5 + $0x60] sm:$0xff]
  %v398 = vld [vmem:[%s5 + $0x68] sm:$0xff]
  %v399 = vld [vmem:[%s5 + $0x70] sm:$0xff]
  %v400 = vld [vmem:[%s5 + $0x78] sm:$0xff]
  %s401 = scalar_lea.vmem %s11, 8
  %v402 = vld [vmem:[%s401] sm:$0xff]
  %403 = vmatprep.subr.mxu0 0.0
  %404 = vmatpush1.msra.mxu0 %v400
  %405 = vmatprep.subr.mxu0 0.0
  %406 = vmatpush1.msra.mxu0 %v399
  %407 = vmatprep.subr.mxu0 0.0
  %408 = vmatpush1.msra.mxu0 %v398
  %409 = vmatprep.subr.mxu0 0.0
  %410 = vmatpush1.msra.mxu0 %v397
  %411 = vmatprep.subr.mxu0 0.0
  %412 = vmatpush1.msra.mxu0 %v396
  %413 = vmatprep.subr.mxu0 0.0
  %414 = vmatpush1.msra.mxu0 %v395
  %415 = vmatprep.subr.mxu0 0.0
  %416 = vmatpush1.msra.mxu0 %v394
  %417 = vmatprep.subr.mxu0 0.0
  %418 = vmatpush1.msra.mxu0 %v393
  %419 = vmatprep.subr.mxu0 0.0
  %420 = vmatpush1.msra.mxu0 %v392
  %421 = vmatprep.subr.mxu0 0.0
  %422 = vmatpush1.msra.mxu0 %v391
  %423 = vmatprep.subr.mxu0 0.0
  %424 = vmatpush1.msra.mxu0 %v390
  %425 = vmatprep.subr.mxu0 0.0
  %426 = vmatpush1.msra.mxu0 %v389
  %427 = vmatprep.subr.mxu0 0.0
  %428 = vmatpush1.msra.mxu0 %v388
  %429 = vmatprep.subr.mxu0 0.0
  %430 = vmatpush1.msra.mxu0 %v387
  %431 = vmatprep.subr.mxu0 0.0
  %432 = vmatpush1.msra.mxu0 %v386
  %433 = vmatprep.subr.mxu0 0.0
  %434 = vmatpush1.msra.mxu0 %v385
  %435 = vmatprep.subr.mxu0 0.0
  %436 = vmatpush2.msra.mxu0 0.0
  %437 = vmatprep.subr.mxu0 0.0
  %438 = vmatpush2.msra.mxu0 0.0
  %439 = vmatprep.subr.mxu0 0.0
  %440 = vmatpush2.msra.mxu0 0.0
  %441 = vmatprep.subr.mxu0 0.0
  %442 = vmatpush2.msra.mxu0 0.0
  %443 = vmatprep.subr.mxu0 0.0
  %444 = vmatpush2.msra.mxu0 0.0
  %445 = vmatprep.subr.mxu0 0.0
  %446 = vmatpush2.msra.mxu0 0.0
  %447 = vmatprep.subr.mxu0 0.0
  %448 = vmatpush2.msra.mxu0 0.0
  %449 = vmatprep.subr.mxu0 0.0
  %450 = vmatpush2.msra.mxu0 0.0
  %451 = vmatprep.subr.mxu0 0.0
  %452 = vmatpush2.msra.mxu0 0.0
  %453 = vmatprep.subr.mxu0 0.0
  %454 = vmatpush2.msra.mxu0 0.0
  %455 = vmatprep.subr.mxu0 0.0
  %456 = vmatpush2.msra.mxu0 0.0
  %457 = vmatprep.subr.mxu0 0.0
  %458 = vmatpush2.msra.mxu0 0.0
  %459 = vmatprep.subr.mxu0 0.0
  %460 = vmatpush2.msra.mxu0 0.0
  %461 = vmatprep.subr.mxu0 0.0
  %462 = vmatpush2.msra.mxu0 0.0
  %463 = vmatprep.subr.mxu0 0.0
  %464 = vmatpush2.msra.mxu0 0.0
  %465 = vmatprep.subr.mxu0 0.0
  %466 = vmatpush2.msra.mxu0 0.0
  %467 = vmatprep.mubr.f32.mxu0 0.0
  %468 = vmatmul.mubr.f32.gmra.mxu0 %v383
  %v469 = vpop.f32.mrf.mxu0
  %v470 = vadd.f32 %v402, %v469
  %v471 = vpop.f32.mrf.mxu0
  %472 = vdwg.mxu0
  %v473 = vtanh.pop %v470
  %s474 = scalar_lea.vmem %s0, 8
  %v475 = vld [vmem:[%s474] sm:$0xff]
  %477 = vset.pattern.permute.xlu0 0
  %478 = vperm.xlu0 %477, %v475
  %v479 = vpop.permute.xlu0 %478
  %v481 = vmul.f32 %v479, %v473
  %v482 = vadd.f32 %v383, %v481
  %483 = vst [vmem:[%s401] sm:$0xff] %v482
  %v484 = vld [vmem:[%s5] sm:$0xff]
  %v485 = vld [vmem:[%s5 + $0x8] sm:$0xff]
  %v486 = vld [vmem:[%s5 + $0x10] sm:$0xff]
  %v487 = vld [vmem:[%s5 + $0x18] sm:$0xff]
  %v488 = vld [vmem:[%s5 + $0x20] sm:$0xff]
  %v489 = vld [vmem:[%s5 + $0x28] sm:$0xff]
  %v490 = vld [vmem:[%s5 + $0x30] sm:$0xff]
  %v491 = vld [vmem:[%s5 + $0x38] sm:$0xff]
  %v492 = vld [vmem:[%s5 + $0x40] sm:$0xff]
  %v493 = vld [vmem:[%s5 + $0x48] sm:$0xff]
  %v494 = vld [vmem:[%s5 + $0x50] sm:$0xff]
  %v495 = vld [vmem:[%s5 + $0x58] sm:$0xff]
  %v496 = vld [vmem:[%s5 + $0x60] sm:$0xff]
  %v497 = vld [vmem:[%s5 + $0x68] sm:$0xff]
  %v498 = vld [vmem:[%s5 + $0x70] sm:$0xff]
  %v499 = vld [vmem:[%s5 + $0x78] sm:$0xff]
  %s500 = scalar_lea.vmem %s11, 16
  %v501 = vld [vmem:[%s500] sm:$0xff]
  %502 = vmatprep.subr.mxu0 0.0
  %503 = vmatpush1.msra.mxu0 %v499
  %504 = vmatprep.subr.mxu0 0.0
  %505 = vmatpush1.msra.mxu0 %v498
  %506 = vmatprep.subr.mxu0 0.0
  %507 = vmatpush1.msra.mxu0 %v497
  %508 = vmatprep.subr.mxu0 0.0
  %509 = vmatpush1.msra.mxu0 %v496
  %510 = vmatprep.subr.mxu0 0.0
  %511 = vmatpush1.msra.mxu0 %v495
  %512 = vmatprep.subr.mxu0 0.0
  %513 = vmatpush1.msra.mxu0 %v494
  %514 = vmatprep.subr.mxu0 0.0
  %515 = vmatpush1.msra.mxu0 %v493
  %516 = vmatprep.subr.mxu0 0.0
  %517 = vmatpush1.msra.mxu0 %v492
  %518 = vmatprep.subr.mxu0 0.0
  %519 = vmatpush1.msra.mxu0 %v491
  %520 = vmatprep.subr.mxu0 0.0
  %521 = vmatpush1.msra.mxu0 %v490
  %522 = vmatprep.subr.mxu0 0.0
  %523 = vmatpush1.msra.mxu0 %v489
  %524 = vmatprep.subr.mxu0 0.0
  %525 = vmatpush1.msra.mxu0 %v488
  %526 = vmatprep.subr.mxu0 0.0
  %527 = vmatpush1.msra.mxu0 %v487
  %528 = vmatprep.subr.mxu0 0.0
  %529 = vmatpush1.msra.mxu0 %v486
  %530 = vmatprep.subr.mxu0 0.0
  %531 = vmatpush1.msra.mxu0 %v485
  %532 = vmatprep.subr.mxu0 0.0
  %533 = vmatpush1.msra.mxu0 %v484
  %534 = vmatprep.subr.mxu0 0.0
  %535 = vmatpush2.msra.mxu0 0.0
  %536 = vmatprep.subr.mxu0 0.0
  %537 = vmatpush2.msra.mxu0 0.0
  %538 = vmatprep.subr.mxu0 0.0
  %539 = vmatpush2.msra.mxu0 0.0
  %540 = vmatprep.subr.mxu0 0.0
  %541 = vmatpush2.msra.mxu0 0.0
  %542 = vmatprep.subr.mxu0 0.0
  %543 = vmatpush2.msra.mxu0 0.0
  %544 = vmatprep.subr.mxu0 0.0
  %545 = vmatpush2.msra.mxu0 0.0
  %546 = vmatprep.subr.mxu0 0.0
  %547 = vmatpush2.msra.mxu0 0.0
  %548 = vmatprep.subr.mxu0 0.0
  %549 = vmatpush2.msra.mxu0 0.0
  %550 = vmatprep.subr.mxu0 0.0
  %551 = vmatpush2.msra.mxu0 0.0
  %552 = vmatprep.subr.mxu0 0.0
  %553 = vmatpush2.msra.mxu0 0.0
  %554 = vmatprep.subr.mxu0 0.0
  %555 = vmatpush2.msra.mxu0 0.0
  %556 = vmatprep.subr.mxu0 0.0
  %557 = vmatpush2.msra.mxu0 0.0
  %558 = vmatprep.subr.mxu0 0.0
  %559 = vmatpush2.msra.mxu0 0.0
  %560 = vmatprep.subr.mxu0 0.0
  %561 = vmatpush2.msra.mxu0 0.0
  %562 = vmatprep.subr.mxu0 0.0
  %563 = vmatpush2.msra.mxu0 0.0
  %564 = vmatprep.subr.mxu0 0.0
  %565 = vmatpush2.msra.mxu0 0.0
  %566 = vmatprep.mubr.f32.mxu0 0.0
  %567 = vmatmul.mubr.f32.gmra.mxu0 %v482
  %v568 = vpop.f32.mrf.mxu0
  %v569 = vadd.f32 %v501, %v568
  %v570 = vpop.f32.mrf.mxu0
  %571 = vdwg.mxu0
  %v572 = vtanh.pop %v569
  %s573 = scalar_lea.vmem %s0, 16
  %v574 = vld [vmem:[%s573] sm:$0xff]
  %576 = vset.pattern.permute.xlu0 0
  %577 = vperm.xlu0 %576, %v574
  %v578 = vpop.permute.xlu0 %577
  %v580 = vmul.f32 %v578, %v572
  %v581 = vadd.f32 %v482, %v580
  %582 = vst [vmem:[%s500] sm:$0xff] %v581
  %v583 = vld [vmem:[%s5] sm:$0xff]
  %v584 = vld [vmem:[%s5 + $0x8] sm:$0xff]
  %v585 = vld [vmem:[%s5 + $0x10] sm:$0xff]
  %v586 = vld [vmem:[%s5 + $0x18] sm:$0xff]
  %v587 = vld [vmem:[%s5 + $0x20] sm:$0xff]
  %v588 = vld [vmem:[%s5 + $0x28] sm:$0xff]
  %v589 = vld [vmem:[%s5 + $0x30] sm:$0xff]
  %v590 = vld [vmem:[%s5 + $0x38] sm:$0xff]
  %v591 = vld [vmem:[%s5 + $0x40] sm:$0xff]
  %v592 = vld [vmem:[%s5 + $0x48] sm:$0xff]
  %v593 = vld [vmem:[%s5 + $0x50] sm:$0xff]
  %v594 = vld [vmem:[%s5 + $0x58] sm:$0xff]
  %v595 = vld [vmem:[%s5 + $0x60] sm:$0xff]
  %v596 = vld [vmem:[%s5 + $0x68] sm:$0xff]
  %v597 = vld [vmem:[%s5 + $0x70] sm:$0xff]
  %v598 = vld [vmem:[%s5 + $0x78] sm:$0xff]
  %s599 = scalar_lea.vmem %s11, 24
  %v600 = vld [vmem:[%s599] sm:$0xff]
  %601 = vmatprep.subr.mxu0 0.0
  %602 = vmatpush1.msra.mxu0 %v598
  %603 = vmatprep.subr.mxu0 0.0
  %604 = vmatpush1.msra.mxu0 %v597
  %605 = vmatprep.subr.mxu0 0.0
  %606 = vmatpush1.msra.mxu0 %v596
  %607 = vmatprep.subr.mxu0 0.0
  %608 = vmatpush1.msra.mxu0 %v595
  %609 = vmatprep.subr.mxu0 0.0
  %610 = vmatpush1.msra.mxu0 %v594
  %611 = vmatprep.subr.mxu0 0.0
  %612 = vmatpush1.msra.mxu0 %v593
  %613 = vmatprep.subr.mxu0 0.0
  %614 = vmatpush1.msra.mxu0 %v592
  %615 = vmatprep.subr.mxu0 0.0
  %616 = vmatpush1.msra.mxu0 %v591
  %617 = vmatprep.subr.mxu0 0.0
  %618 = vmatpush1.msra.mxu0 %v590
  %619 = vmatprep.subr.mxu0 0.0
  %620 = vmatpush1.msra.mxu0 %v589
  %621 = vmatprep.subr.mxu0 0.0
  %622 = vmatpush1.msra.mxu0 %v588
  %623 = vmatprep.subr.mxu0 0.0
  %624 = vmatpush1.msra.mxu0 %v587
  %625 = vmatprep.subr.mxu0 0.0
  %626 = vmatpush1.msra.mxu0 %v586
  %627 = vmatprep.subr.mxu0 0.0
  %628 = vmatpush1.msra.mxu0 %v585
  %629 = vmatprep.subr.mxu0 0.0
  %630 = vmatpush1.msra.mxu0 %v584
  %631 = vmatprep.subr.mxu0 0.0
  %632 = vmatpush1.msra.mxu0 %v583
  %633 = vmatprep.subr.mxu0 0.0
  %634 = vmatpush2.msra.mxu0 0.0
  %635 = vmatprep.subr.mxu0 0.0
  %636 = vmatpush2.msra.mxu0 0.0
  %637 = vmatprep.subr.mxu0 0.0
  %638 = vmatpush2.msra.mxu0 0.0
  %639 = vmatprep.subr.mxu0 0.0
  %640 = vmatpush2.msra.mxu0 0.0
  %641 = vmatprep.subr.mxu0 0.0
  %642 = vmatpush2.msra.mxu0 0.0
  %643 = vmatprep.subr.mxu0 0.0
  %644 = vmatpush2.msra.mxu0 0.0
  %645 = vmatprep.subr.mxu0 0.0
  %646 = vmatpush2.msra.mxu0 0.0
  %647 = vmatprep.subr.mxu0 0.0
  %648 = vmatpush2.msra.mxu0 0.0
  %649 = vmatprep.subr.mxu0 0.0
  %650 = vmatpush2.msra.mxu0 0.0
  %651 = vmatprep.subr.mxu0 0.0
  %652 = vmatpush2.msra.mxu0 0.0
  %653 = vmatprep.subr.mxu0 0.0
  %654 = vmatpush2.msra.mxu0 0.0
  %655 = vmatprep.subr.mxu0 0.0
  %656 = vmatpush2.msra.mxu0 0.0
  %657 = vmatprep.subr.mxu0 0.0
  %658 = vmatpush2.msra.mxu0 0.0
  %659 = vmatprep.subr.mxu0 0.0
  %660 = vmatpush2.msra.mxu0 0.0
  %661 = vmatprep.subr.mxu0 0.0
  %662 = vmatpush2.msra.mxu0 0.0
  %663 = vmatprep.subr.mxu0 0.0
  %664 = vmatpush2.msra.mxu0 0.0
  %665 = vmatprep.mubr.f32.mxu0 0.0
  %666 = vmatmul.mubr.f32.gmra.mxu0 %v581
  %v667 = vpop.f32.mrf.mxu0
  %v668 = vadd.f32 %v600, %v667
  %v669 = vpop.f32.mrf.mxu0
  %670 = vdwg.mxu0
  %v671 = vtanh.pop %v668
  %s672 = scalar_lea.vmem %s0, 24
  %v673 = vld [vmem:[%s672] sm:$0xff]
  %675 = vset.pattern.permute.xlu0 0
  %676 = vperm.xlu0 %675, %v673
  %v677 = vpop.permute.xlu0 %676
  %v679 = vmul.f32 %v677, %v671
  %v680 = vadd.f32 %v581, %v679
  %681 = vst [vmem:[%s599] sm:$0xff] %v680
  %v682 = vld [vmem:[%s5] sm:$0xff]
  %v683 = vld [vmem:[%s5 + $0x8] sm:$0xff]
  %v684 = vld [vmem:[%s5 + $0x10] sm:$0xff]
  %v685 = vld [vmem:[%s5 + $0x18] sm:$0xff]
  %v686 = vld [vmem:[%s5 + $0x20] sm:$0xff]
  %v687 = vld [vmem:[%s5 + $0x28] sm:$0xff]
  %v688 = vld [vmem:[%s5 + $0x30] sm:$0xff]
  %v689 = vld [vmem:[%s5 + $0x38] sm:$0xff]
  %v690 = vld [vmem:[%s5 + $0x40] sm:$0xff]
  %v691 = vld [vmem:[%s5 + $0x48] sm:$0xff]
  %v692 = vld [vmem:[%s5 + $0x50] sm:$0xff]
  %v693 = vld [vmem:[%s5 + $0x58] sm:$0xff]
  %v694 = vld [vmem:[%s5 + $0x60] sm:$0xff]
  %v695 = vld [vmem:[%s5 + $0x68] sm:$0xff]
  %v696 = vld [vmem:[%s5 + $0x70] sm:$0xff]
  %v697 = vld [vmem:[%s5 + $0x78] sm:$0xff]
  %s698 = scalar_lea.vmem %s11, 32
  %v699 = vld [vmem:[%s698] sm:$0xff]
  %700 = vmatprep.subr.mxu0 0.0
  %701 = vmatpush1.msra.mxu0 %v697
  %702 = vmatprep.subr.mxu0 0.0
  %703 = vmatpush1.msra.mxu0 %v696
  %704 = vmatprep.subr.mxu0 0.0
  %705 = vmatpush1.msra.mxu0 %v695
  %706 = vmatprep.subr.mxu0 0.0
  %707 = vmatpush1.msra.mxu0 %v694
  %708 = vmatprep.subr.mxu0 0.0
  %709 = vmatpush1.msra.mxu0 %v693
  %710 = vmatprep.subr.mxu0 0.0
  %711 = vmatpush1.msra.mxu0 %v692
  %712 = vmatprep.subr.mxu0 0.0
  %713 = vmatpush1.msra.mxu0 %v691
  %714 = vmatprep.subr.mxu0 0.0
  %715 = vmatpush1.msra.mxu0 %v690
  %716 = vmatprep.subr.mxu0 0.0
  %717 = vmatpush1.msra.mxu0 %v689
  %718 = vmatprep.subr.mxu0 0.0
  %719 = vmatpush1.msra.mxu0 %v688
  %720 = vmatprep.subr.mxu0 0.0
  %721 = vmatpush1.msra.mxu0 %v687
  %722 = vmatprep.subr.mxu0 0.0
  %723 = vmatpush1.msra.mxu0 %v686
  %724 = vmatprep.subr.mxu0 0.0
  %725 = vmatpush1.msra.mxu0 %v685
  %726 = vmatprep.subr.mxu0 0.0
  %727 = vmatpush1.msra.mxu0 %v684
  %728 = vmatprep.subr.mxu0 0.0
  %729 = vmatpush1.msra.mxu0 %v683
  %730 = vmatprep.subr.mxu0 0.0
  %731 = vmatpush1.msra.mxu0 %v682
  %732 = vmatprep.subr.mxu0 0.0
  %733 = vmatpush2.msra.mxu0 0.0
  %734 = vmatprep.subr.mxu0 0.0
  %735 = vmatpush2.msra.mxu0 0.0
  %736 = vmatprep.subr.mxu0 0.0
  %737 = vmatpush2.msra.mxu0 0.0
  %738 = vmatprep.subr.mxu0 0.0
  %739 = vmatpush2.msra.mxu0 0.0
  %740 = vmatprep.subr.mxu0 0.0
  %741 = vmatpush2.msra.mxu0 0.0
  %742 = vmatprep.subr.mxu0 0.0
  %743 = vmatpush2.msra.mxu0 0.0
  %744 = vmatprep.subr.mxu0 0.0
  %745 = vmatpush2.msra.mxu0 0.0
  %746 = vmatprep.subr.mxu0 0.0
  %747 = vmatpush2.msra.mxu0 0.0
  %748 = vmatprep.subr.mxu0 0.0
  %749 = vmatpush2.msra.mxu0 0.0
  %750 = vmatprep.subr.mxu0 0.0
  %751 = vmatpush2.msra.mxu0 0.0
  %752 = vmatprep.subr.mxu0 0.0
  %753 = vmatpush2.msra.mxu0 0.0
  %754 = vmatprep.subr.mxu0 0.0
  %755 = vmatpush2.msra.mxu0 0.0
  %756 = vmatprep.subr.mxu0 0.0
  %757 = vmatpush2.msra.mxu0 0.0
  %758 = vmatprep.subr.mxu0 0.0
  %759 = vmatpush2.msra.mxu0 0.0
  %760 = vmatprep.subr.mxu0 0.0
  %761 = vmatpush2.msra.mxu0 0.0
  %762 = vmatprep.subr.mxu0 0.0
  %763 = vmatpush2.msra.mxu0 0.0
  %764 = vmatprep.mubr.f32.mxu0 0.0
  %765 = vmatmul.mubr.f32.gmra.mxu0 %v680
  %v766 = vpop.f32.mrf.mxu0
  %v767 = vadd.f32 %v699, %v766
  %v768 = vpop.f32.mrf.mxu0
  %769 = vdwg.mxu0
  %v770 = vtanh.pop %v767
  %s771 = scalar_lea.vmem %s0, 32
  %v772 = vld [vmem:[%s771] sm:$0xff]
  %774 = vset.pattern.permute.xlu0 0
  %775 = vperm.xlu0 %774, %v772
  %v776 = vpop.permute.xlu0 %775
  %v778 = vmul.f32 %v776, %v770
  %v779 = vadd.f32 %v680, %v778
  %780 = vst [vmem:[%s698] sm:$0xff] %v779
  %v781 = vld [vmem:[%s5] sm:$0xff]
  %v782 = vld [vmem:[%s5 + $0x8] sm:$0xff]
  %v783 = vld [vmem:[%s5 + $0x10] sm:$0xff]
  %v784 = vld [vmem:[%s5 + $0x18] sm:$0xff]
  %v785 = vld [vmem:[%s5 + $0x20] sm:$0xff]
  %v786 = vld [vmem:[%s5 + $0x28] sm:$0xff]
  %v787 = vld [vmem:[%s5 + $0x30] sm:$0xff]
  %v788 = vld [vmem:[%s5 + $0x38] sm:$0xff]
  %v789 = vld [vmem:[%s5 + $0x40] sm:$0xff]
  %v790 = vld [vmem:[%s5 + $0x48] sm:$0xff]
  %v791 = vld [vmem:[%s5 + $0x50] sm:$0xff]
  %v792 = vld [vmem:[%s5 + $0x58] sm:$0xff]
  %v793 = vld [vmem:[%s5 + $0x60] sm:$0xff]
  %v794 = vld [vmem:[%s5 + $0x68] sm:$0xff]
  %v795 = vld [vmem:[%s5 + $0x70] sm:$0xff]
  %v796 = vld [vmem:[%s5 + $0x78] sm:$0xff]
  %s797 = scalar_lea.vmem %s11, 40
  %v798 = vld [vmem:[%s797] sm:$0xff]
  %799 = vmatprep.subr.mxu0 0.0
  %800 = vmatpush1.msra.mxu0 %v796
  %801 = vmatprep.subr.mxu0 0.0
  %802 = vmatpush1.msra.mxu0 %v795
  %803 = vmatprep.subr.mxu0 0.0
  %804 = vmatpush1.msra.mxu0 %v794
  %805 = vmatprep.subr.mxu0 0.0
  %806 = vmatpush1.msra.mxu0 %v793
  %807 = vmatprep.subr.mxu0 0.0
  %808 = vmatpush1.msra.mxu0 %v792
  %809 = vmatprep.subr.mxu0 0.0
  %810 = vmatpush1.msra.mxu0 %v791
  %811 = vmatprep.subr.mxu0 0.0
  %812 = vmatpush1.msra.mxu0 %v790
  %813 = vmatprep.subr.mxu0 0.0
  %814 = vmatpush1.msra.mxu0 %v789
  %815 = vmatprep.subr.mxu0 0.0
  %816 = vmatpush1.msra.mxu0 %v788
  %817 = vmatprep.subr.mxu0 0.0
  %818 = vmatpush1.msra.mxu0 %v787
  %819 = vmatprep.subr.mxu0 0.0
  %820 = vmatpush1.msra.mxu0 %v786
  %821 = vmatprep.subr.mxu0 0.0
  %822 = vmatpush1.msra.mxu0 %v785
  %823 = vmatprep.subr.mxu0 0.0
  %824 = vmatpush1.msra.mxu0 %v784
  %825 = vmatprep.subr.mxu0 0.0
  %826 = vmatpush1.msra.mxu0 %v783
  %827 = vmatprep.subr.mxu0 0.0
  %828 = vmatpush1.msra.mxu0 %v782
  %829 = vmatprep.subr.mxu0 0.0
  %830 = vmatpush1.msra.mxu0 %v781
  %831 = vmatprep.subr.mxu0 0.0
  %832 = vmatpush2.msra.mxu0 0.0
  %833 = vmatprep.subr.mxu0 0.0
  %834 = vmatpush2.msra.mxu0 0.0
  %835 = vmatprep.subr.mxu0 0.0
  %836 = vmatpush2.msra.mxu0 0.0
  %837 = vmatprep.subr.mxu0 0.0
  %838 = vmatpush2.msra.mxu0 0.0
  %839 = vmatprep.subr.mxu0 0.0
  %840 = vmatpush2.msra.mxu0 0.0
  %841 = vmatprep.subr.mxu0 0.0
  %842 = vmatpush2.msra.mxu0 0.0
  %843 = vmatprep.subr.mxu0 0.0
  %844 = vmatpush2.msra.mxu0 0.0
  %845 = vmatprep.subr.mxu0 0.0
  %846 = vmatpush2.msra.mxu0 0.0
  %847 = vmatprep.subr.mxu0 0.0
  %848 = vmatpush2.msra.mxu0 0.0
  %849 = vmatprep.subr.mxu0 0.0
  %850 = vmatpush2.msra.mxu0 0.0
  %851 = vmatprep.subr.mxu0 0.0
  %852 = vmatpush2.msra.mxu0 0.0
  %853 = vmatprep.subr.mxu0 0.0
  %854 = vmatpush2.msra.mxu0 0.0
  %855 = vmatprep.subr.mxu0 0.0
  %856 = vmatpush2.msra.mxu0 0.0
  %857 = vmatprep.subr.mxu0 0.0
  %858 = vmatpush2.msra.mxu0 0.0
  %859 = vmatprep.subr.mxu0 0.0
  %860 = vmatpush2.msra.mxu0 0.0
  %861 = vmatprep.subr.mxu0 0.0
  %862 = vmatpush2.msra.mxu0 0.0
  %863 = vmatprep.mubr.f32.mxu0 0.0
  %864 = vmatmul.mubr.f32.gmra.mxu0 %v779
  %v865 = vpop.f32.mrf.mxu0
  %v866 = vadd.f32 %v798, %v865
  %v867 = vpop.f32.mrf.mxu0
  %868 = vdwg.mxu0
  %v869 = vtanh.pop %v866
  %s870 = scalar_lea.vmem %s0, 40
  %v871 = vld [vmem:[%s870] sm:$0xff]
  %873 = vset.pattern.permute.xlu0 0
  %874 = vperm.xlu0 %873, %v871
  %v875 = vpop.permute.xlu0 %874
  %v877 = vmul.f32 %v875, %v869
  %v878 = vadd.f32 %v779, %v877
  %879 = vst [vmem:[%s797] sm:$0xff] %v878
  %v880 = vld [vmem:[%s5] sm:$0xff]
  %v881 = vld [vmem:[%s5 + $0x8] sm:$0xff]
  %v882 = vld [vmem:[%s5 + $0x10] sm:$0xff]
  %v883 = vld [vmem:[%s5 + $0x18] sm:$0xff]
  %v884 = vld [vmem:[%s5 + $0x20] sm:$0xff]
  %v885 = vld [vmem:[%s5 + $0x28] sm:$0xff]
  %v886 = vld [vmem:[%s5 + $0x30] sm:$0xff]
  %v887 = vld [vmem:[%s5 + $0x38] sm:$0xff]
  %v888 = vld [vmem:[%s5 + $0x40] sm:$0xff]
  %v889 = vld [vmem:[%s5 + $0x48] sm:$0xff]
  %v890 = vld [vmem:[%s5 + $0x50] sm:$0xff]
  %v891 = vld [vmem:[%s5 + $0x58] sm:$0xff]
  %v892 = vld [vmem:[%s5 + $0x60] sm:$0xff]
  %v893 = vld [vmem:[%s5 + $0x68] sm:$0xff]
  %v894 = vld [vmem:[%s5 + $0x70] sm:$0xff]
  %v895 = vld [vmem:[%s5 + $0x78] sm:$0xff]
  %s896 = scalar_lea.vmem %s11, 48
  %v897 = vld [vmem:[%s896] sm:$0xff]
  %898 = vmatprep.subr.mxu0 0.0
  %899 = vmatpush1.msra.mxu0 %v895
  %900 = vmatprep.subr.mxu0 0.0
  %901 = vmatpush1.msra.mxu0 %v894
  %902 = vmatprep.subr.mxu0 0.0
  %903 = vmatpush1.msra.mxu0 %v893
  %904 = vmatprep.subr.mxu0 0.0
  %905 = vmatpush1.msra.mxu0 %v892
  %906 = vmatprep.subr.mxu0 0.0
  %907 = vmatpush1.msra.mxu0 %v891
  %908 = vmatprep.subr.mxu0 0.0
  %909 = vmatpush1.msra.mxu0 %v890
  %910 = vmatprep.subr.mxu0 0.0
  %911 = vmatpush1.msra.mxu0 %v889
  %912 = vmatprep.subr.mxu0 0.0
  %913 = vmatpush1.msra.mxu0 %v888
  %914 = vmatprep.subr.mxu0 0.0
  %915 = vmatpush1.msra.mxu0 %v887
  %916 = vmatprep.subr.mxu0 0.0
  %917 = vmatpush1.msra.mxu0 %v886
  %918 = vmatprep.subr.mxu0 0.0
  %919 = vmatpush1.msra.mxu0 %v885
  %920 = vmatprep.subr.mxu0 0.0
  %921 = vmatpush1.msra.mxu0 %v884
  %922 = vmatprep.subr.mxu0 0.0
  %923 = vmatpush1.msra.mxu0 %v883
  %924 = vmatprep.subr.mxu0 0.0
  %925 = vmatpush1.msra.mxu0 %v882
  %926 = vmatprep.subr.mxu0 0.0
  %927 = vmatpush1.msra.mxu0 %v881
  %928 = vmatprep.subr.mxu0 0.0
  %929 = vmatpush1.msra.mxu0 %v880
  %930 = vmatprep.subr.mxu0 0.0
  %931 = vmatpush2.msra.mxu0 0.0
  %932 = vmatprep.subr.mxu0 0.0
  %933 = vmatpush2.msra.mxu0 0.0
  %934 = vmatprep.subr.mxu0 0.0
  %935 = vmatpush2.msra.mxu0 0.0
  %936 = vmatprep.subr.mxu0 0.0
  %937 = vmatpush2.msra.mxu0 0.0
  %938 = vmatprep.subr.mxu0 0.0
  %939 = vmatpush2.msra.mxu0 0.0
  %940 = vmatprep.subr.mxu0 0.0
  %941 = vmatpush2.msra.mxu0 0.0
  %942 = vmatprep.subr.mxu0 0.0
  %943 = vmatpush2.msra.mxu0 0.0
  %944 = vmatprep.subr.mxu0 0.0
  %945 = vmatpush2.msra.mxu0 0.0
  %946 = vmatprep.subr.mxu0 0.0
  %947 = vmatpush2.msra.mxu0 0.0
  %948 = vmatprep.subr.mxu0 0.0
  %949 = vmatpush2.msra.mxu0 0.0
  %950 = vmatprep.subr.mxu0 0.0
  %951 = vmatpush2.msra.mxu0 0.0
  %952 = vmatprep.subr.mxu0 0.0
  %953 = vmatpush2.msra.mxu0 0.0
  %954 = vmatprep.subr.mxu0 0.0
  %955 = vmatpush2.msra.mxu0 0.0
  %956 = vmatprep.subr.mxu0 0.0
  %957 = vmatpush2.msra.mxu0 0.0
  %958 = vmatprep.subr.mxu0 0.0
  %959 = vmatpush2.msra.mxu0 0.0
  %960 = vmatprep.subr.mxu0 0.0
  %961 = vmatpush2.msra.mxu0 0.0
  %962 = vmatprep.mubr.f32.mxu0 0.0
  %963 = vmatmul.mubr.f32.gmra.mxu0 %v878
  %v964 = vpop.f32.mrf.mxu0
  %v965 = vadd.f32 %v897, %v964
  %v966 = vpop.f32.mrf.mxu0
  %967 = vdwg.mxu0
  %v968 = vtanh.pop %v965
  %s969 = scalar_lea.vmem %s0, 48
  %v970 = vld [vmem:[%s969] sm:$0xff]
  %972 = vset.pattern.permute.xlu0 0
  %973 = vperm.xlu0 %972, %v970
  %v974 = vpop.permute.xlu0 %973
  %v976 = vmul.f32 %v974, %v968
  %v977 = vadd.f32 %v878, %v976
  %978 = vst [vmem:[%s896] sm:$0xff] %v977
  %v979 = vld [vmem:[%s5] sm:$0xff]
  %v980 = vld [vmem:[%s5 + $0x8] sm:$0xff]
  %v981 = vld [vmem:[%s5 + $0x10] sm:$0xff]
  %v982 = vld [vmem:[%s5 + $0x18] sm:$0xff]
  %v983 = vld [vmem:[%s5 + $0x20] sm:$0xff]
  %v984 = vld [vmem:[%s5 + $0x28] sm:$0xff]
  %v985 = vld [vmem:[%s5 + $0x30] sm:$0xff]
  %v986 = vld [vmem:[%s5 + $0x38] sm:$0xff]
  %v987 = vld [vmem:[%s5 + $0x40] sm:$0xff]
  %v988 = vld [vmem:[%s5 + $0x48] sm:$0xff]
  %v989 = vld [vmem:[%s5 + $0x50] sm:$0xff]
  %v990 = vld [vmem:[%s5 + $0x58] sm:$0xff]
  %v991 = vld [vmem:[%s5 + $0x60] sm:$0xff]
  %v992 = vld [vmem:[%s5 + $0x68] sm:$0xff]
  %v993 = vld [vmem:[%s5 + $0x70] sm:$0xff]
  %v994 = vld [vmem:[%s5 + $0x78] sm:$0xff]
  %s995 = scalar_lea.vmem %s11, 56
  %v996 = vld [vmem:[%s995] sm:$0xff]
  %997 = vmatprep.subr.mxu0 0.0
  %998 = vmatpush1.msra.mxu0 %v994
  %999 = vmatprep.subr.mxu0 0.0
  %1000 = vmatpush1.msra.mxu0 %v993
  %1001 = vmatprep.subr.mxu0 0.0
  %1002 = vmatpush1.msra.mxu0 %v992
  %1003 = vmatprep.subr.mxu0 0.0
  %1004 = vmatpush1.msra.mxu0 %v991
  %1005 = vmatprep.subr.mxu0 0.0
  %1006 = vmatpush1.msra.mxu0 %v990
  %1007 = vmatprep.subr.mxu0 0.0
  %1008 = vmatpush1.msra.mxu0 %v989
  %1009 = vmatprep.subr.mxu0 0.0
  %1010 = vmatpush1.msra.mxu0 %v988
  %1011 = vmatprep.subr.mxu0 0.0
  %1012 = vmatpush1.msra.mxu0 %v987
  %1013 = vmatprep.subr.mxu0 0.0
  %1014 = vmatpush1.msra.mxu0 %v986
  %1015 = vmatprep.subr.mxu0 0.0
  %1016 = vmatpush1.msra.mxu0 %v985
  %1017 = vmatprep.subr.mxu0 0.0
  %1018 = vmatpush1.msra.mxu0 %v984
  %1019 = vmatprep.subr.mxu0 0.0
  %1020 = vmatpush1.msra.mxu0 %v983
  %1021 = vmatprep.subr.mxu0 0.0
  %1022 = vmatpush1.msra.mxu0 %v982
  %1023 = vmatprep.subr.mxu0 0.0
  %1024 = vmatpush1.msra.mxu0 %v981
  %1025 = vmatprep.subr.mxu0 0.0
  %1026 = vmatpush1.msra.mxu0 %v980
  %1027 = vmatprep.subr.mxu0 0.0
  %1028 = vmatpush1.msra.mxu0 %v979
  %1029 = vmatprep.subr.mxu0 0.0
  %1030 = vmatpush2.msra.mxu0 0.0
  %1031 = vmatprep.subr.mxu0 0.0
  %1032 = vmatpush2.msra.mxu0 0.0
  %1033 = vmatprep.subr.mxu0 0.0
  %1034 = vmatpush2.msra.mxu0 0.0
  %1035 = vmatprep.subr.mxu0 0.0
  %1036 = vmatpush2.msra.mxu0 0.0
  %1037 = vmatprep.subr.mxu0 0.0
  %1038 = vmatpush2.msra.mxu0 0.0
  %1039 = vmatprep.subr.mxu0 0.0
  %1040 = vmatpush2.msra.mxu0 0.0
  %1041 = vmatprep.subr.mxu0 0.0
  %1042 = vmatpush2.msra.mxu0 0.0
  %1043 = vmatprep.subr.mxu0 0.0
  %1044 = vmatpush2.msra.mxu0 0.0
  %1045 = vmatprep.subr.mxu0 0.0
  %1046 = vmatpush2.msra.mxu0 0.0
  %1047 = vmatprep.subr.mxu0 0.0
  %1048 = vmatpush2.msra.mxu0 0.0
  %1049 = vmatprep.subr.mxu0 0.0
  %1050 = vmatpush2.msra.mxu0 0.0
  %1051 = vmatprep.subr.mxu0 0.0
  %1052 = vmatpush2.msra.mxu0 0.0
  %1053 = vmatprep.subr.mxu0 0.0
  %1054 = vmatpush2.msra.mxu0 0.0
  %1055 = vmatprep.subr.mxu0 0.0
  %1056 = vmatpush2.msra.mxu0 0.0
  %1057 = vmatprep.subr.mxu0 0.0
  %1058 = vmatpush2.msra.mxu0 0.0
  %1059 = vmatprep.subr.mxu0 0.0
  %1060 = vmatpush2.msra.mxu0 0.0
  %1061 = vmatprep.mubr.f32.mxu0 0.0
  %1062 = vmatmul.mubr.f32.gmra.mxu0 %v977
  %v1063 = vpop.f32.mrf.mxu0
  %v1064 = vadd.f32 %v996, %v1063
  %v1065 = vpop.f32.mrf.mxu0
  %1066 = vdwg.mxu0
  %v1067 = vtanh.pop %v1064
  %s1068 = scalar_lea.vmem %s0, 56
  %v1069 = vld [vmem:[%s1068] sm:$0xff]
  %1071 = vset.pattern.permute.xlu0 0
  %1072 = vperm.xlu0 %1071, %v1069
  %v1073 = vpop.permute.xlu0 %1072
  %v1075 = vmul.f32 %v1073, %v1067
  %v1076 = vadd.f32 %v977, %v1075
  %1077 = vst [vmem:[%s995] sm:$0xff] %v1076
  %1078 = vst [vmem:[#allocation2] sm:$0xff] %v1076
  %v1079 = vld [vmem:[%s11] sm:$0xff]
  %v1080 = vld [vmem:[%s11 + $0x8] sm:$0xff]
  %v1081 = vld [vmem:[%s11 + $0x10] sm:$0xff]
  %v1082 = vld [vmem:[%s11 + $0x18] sm:$0xff]
  %v1083 = vld [vmem:[%s11 + $0x20] sm:$0xff]
  %v1084 = vld [vmem:[%s11 + $0x28] sm:$0xff]
  %v1085 = vld [vmem:[%s11 + $0x30] sm:$0xff]
  %v1086 = vld [vmem:[%s11 + $0x38] sm:$0xff]
  %v1087 = vld [vmem:[%s8] sm:$0xff]
  %v1088 = vld [vmem:[%s8 + $0x8] sm:$0xff]
  %v1089 = vld [vmem:[%s8 + $0x10] sm:$0xff]
  %v1090 = vld [vmem:[%s8 + $0x18] sm:$0xff]
  %v1091 = vld [vmem:[%s8 + $0x20] sm:$0xff]
  %v1092 = vld [vmem:[%s8 + $0x28] sm:$0xff]
  %v1093 = vld [vmem:[%s8 + $0x30] sm:$0xff]
  %v1094 = vld [vmem:[%s8 + $0x38] sm:$0xff]
  %v1095 = vld [vmem:[%s8 + $0x40] sm:$0xff]
  %v1096 = vld [vmem:[%s8 + $0x48] sm:$0xff]
  %v1097 = vld [vmem:[%s8 + $0x50] sm:$0xff]
  %v1098 = vld [vmem:[%s8 + $0x58] sm:$0xff]
  %v1099 = vld [vmem:[%s8 + $0x60] sm:$0xff]
  %v1100 = vld [vmem:[%s8 + $0x68] sm:$0xff]
  %v1101 = vld [vmem:[%s8 + $0x70] sm:$0xff]
  %v1102 = vld [vmem:[%s8 + $0x78] sm:$0xff]
  %v1103 = vld [vmem:[%s9] sm:$0x1]
  %v1105 = vlaneseq
  %v1106 = vshrl.u32 %v1105, 7
  %v1107 = vsub.s32 0, %v1106
  %v1108 = vrot.slane %v1103, %v1107
  %1110 = vmatprep.subr.mxu0 0.0
  %1111 = vmatpush1.msra.mxu0 %v1102
  %1112 = vmatprep.subr.mxu0 0.0
  %1113 = vmatpush1.msra.mxu0 %v1101
  %1114 = vmatprep.subr.mxu0 0.0
  %1115 = vmatpush1.msra.mxu0 %v1100
  %1116 = vmatprep.subr.mxu0 0.0
  %1117 = vmatpush1.msra.mxu0 %v1099
  %1118 = vmatprep.subr.mxu0 0.0
  %1119 = vmatpush1.msra.mxu0 %v1098
  %1120 = vmatprep.subr.mxu0 0.0
  %1121 = vmatpush1.msra.mxu0 %v1097
  %1122 = vmatprep.subr.mxu0 0.0
  %1123 = vmatpush1.msra.mxu0 %v1096
  %1124 = vmatprep.subr.mxu0 0.0
  %1125 = vmatpush1.msra.mxu0 %v1095
  %1126 = vmatprep.subr.mxu0 0.0
  %1127 = vmatpush1.msra.mxu0 %v1094
  %1128 = vmatprep.subr.mxu0 0.0
  %1129 = vmatpush1.msra.mxu0 %v1093
  %1130 = vmatprep.subr.mxu0 0.0
  %1131 = vmatpush1.msra.mxu0 %v1092
  %1132 = vmatprep.subr.mxu0 0.0
  %1133 = vmatpush1.msra.mxu0 %v1091
  %1134 = vmatprep.subr.mxu0 0.0
  %1135 = vmatpush1.msra.mxu0 %v1090
  %1136 = vmatprep.subr.mxu0 0.0
  %1137 = vmatpush1.msra.mxu0 %v1089
  %1138 = vmatprep.subr.mxu0 0.0
  %1139 = vmatpush1.msra.mxu0 %v1088
  %1140 = vmatprep.subr.mxu0 0.0
  %1141 = vmatpush1.msra.mxu0 %v1087
  %1142 = vmatprep.subr.mxu0 0.0
  %1143 = vmatpush2.msra.mxu0 0.0
  %1144 = vmatprep.subr.mxu0 0.0
  %1145 = vmatpush2.msra.mxu0 0.0
  %1146 = vmatprep.subr.mxu0 0.0
  %1147 = vmatpush2.msra.mxu0 0.0
  %1148 = vmatprep.subr.mxu0 0.0
  %1149 = vmatpush2.msra.mxu0 0.0
  %1150 = vmatprep.subr.mxu0 0.0
  %1151 = vmatpush2.msra.mxu0 0.0
  %1152 = vmatprep.subr.mxu0 0.0
  %1153 = vmatpush2.msra.mxu0 0.0
  %1154 = vmatprep.subr.mxu0 0.0
  %1155 = vmatpush2.msra.mxu0 0.0
  %1156 = vmatprep.subr.mxu0 0.0
  %1157 = vmatpush2.msra.mxu0 0.0
  %1158 = vmatprep.subr.mxu0 0.0
  %1159 = vmatpush2.msra.mxu0 0.0
  %1160 = vmatprep.subr.mxu0 0.0
  %1161 = vmatpush2.msra.mxu0 0.0
  %1162 = vmatprep.subr.mxu0 0.0
  %1163 = vmatpush2.msra.mxu0 0.0
  %1164 = vmatprep.subr.mxu0 0.0
  %1165 = vmatpush2.msra.mxu0 0.0
  %1166 = vmatprep.subr.mxu0 0.0
  %1167 = vmatpush2.msra.mxu0 0.0
  %1168 = vmatprep.subr.mxu0 0.0
  %1169 = vmatpush2.msra.mxu0 0.0
  %1170 = vmatprep.subr.mxu0 0.0
  %1171 = vmatpush2.msra.mxu0 0.0
  %1172 = vmatprep.subr.mxu0 0.0
  %1173 = vmatpush2.msra.mxu0 0.0
  %1174 = vmatprep.mubr.f32.mxu0 0.0
  %1175 = vmatmul.mubr.f32.gmra.mxu0 %v1079
  %v1176 = vpop.f32.mrf.mxu0
  %v1177 = vadd.f32 %v1108, %v1176
  %v1178 = vpop.f32.mrf.mxu0
  %1179 = vmatprep.mubr.f32.mxu0 0.0
  %1180 = vmatmul.mubr.f32.gmra.mxu0 %v1080
  %v1181 = vpop.f32.mrf.mxu0
  %v1182 = vadd.f32 %v1108, %v1181
  %v1183 = vpop.f32.mrf.mxu0
  %1184 = vmatprep.mubr.f32.mxu0 0.0
  %1185 = vmatmul.mubr.f32.gmra.mxu0 %v1081
  %v1186 = vpop.f32.mrf.mxu0
  %v1187 = vadd.f32 %v1108, %v1186
  %v1188 = vpop.f32.mrf.mxu0
  %1189 = vmatprep.mubr.f32.mxu0 0.0
  %1190 = vmatmul.mubr.f32.gmra.mxu0 %v1082
  %v1191 = vpop.f32.mrf.mxu0
  %v1192 = vadd.f32 %v1108, %v1191
  %v1193 = vpop.f32.mrf.mxu0
  %1194 = vmatprep.mubr.f32.mxu0 0.0
  %1195 = vmatmul.mubr.f32.gmra.mxu0 %v1083
  %v1196 = vpop.f32.mrf.mxu0
  %v1197 = vadd.f32 %v1108, %v1196
  %v1198 = vpop.f32.mrf.mxu0
  %1199 = vmatprep.mubr.f32.mxu0 0.0
  %1200 = vmatmul.mubr.f32.gmra.mxu0 %v1084
  %v1201 = vpop.f32.mrf.mxu0
  %v1202 = vadd.f32 %v1108, %v1201
  %v1203 = vpop.f32.mrf.mxu0
  %1204 = vmatprep.mubr.f32.mxu0 0.0
  %1205 = vmatmul.mubr.f32.gmra.mxu0 %v1085
  %v1206 = vpop.f32.mrf.mxu0
  %v1207 = vadd.f32 %v1108, %v1206
  %v1208 = vpop.f32.mrf.mxu0
  %1209 = vmatprep.mubr.f32.mxu0 0.0
  %1210 = vmatmul.mubr.f32.gmra.mxu0 %v1086
  %v1211 = vpop.f32.mrf.mxu0
  %v1212 = vadd.f32 %v1108, %v1211
  %v1213 = vpop.f32.mrf.mxu0
  %1214 = vdwg.mxu0
  %1215 = vst [vmem:[%s10] sm:$0xff] %v1177
  %1216 = vst [vmem:[%s10 + $0x8] sm:$0xff] %v1182
  %1217 = vst [vmem:[%s10 + $0x10] sm:$0xff] %v1187
  %1218 = vst [vmem:[%s10 + $0x18] sm:$0xff] %v1192
  %1219 = vst [vmem:[%s10 + $0x20] sm:$0xff] %v1197
  %1220 = vst [vmem:[%s10 + $0x28] sm:$0xff] %v1202
  %1221 = vst [vmem:[%s10 + $0x30] sm:$0xff] %v1207
  %1222 = vst [vmem:[%s10 + $0x38] sm:$0xff] %v1212
  // Predicated region
  $region46: #{ivp_forward.1} parent=0 // pred_check
    _
  $region47: #{ivp_forward.1} parent=0 // pred_check_branch
    %1224 = sbr.rel (0) target = $region49
  $region48: #{ivp_forward.1} parent=0 // pred_region
    _
  $region49: #{ivp_forward.1} parent=0 // pred_fallthru
    _
  // Predicated region
  $region50: #{ivp_forward.1} parent=0 // pred_check
    _
  $region51: #{ivp_forward.1} parent=0 // pred_check_branch
    %1226 = sbr.rel (0) target = $region53
  $region52: #{ivp_forward.1} parent=0 // pred_region
    _
  $region53: #{ivp_forward.1} parent=0 // pred_fallthru
    _
  // Predicated region
  $region54: #{ivp_forward.1} parent=0 // pred_check
    _
  $region55: #{ivp_forward.1} parent=0 // pred_check_branch
    %1228 = sbr.rel (0) target = $region57
  $region56: #{ivp_forward.1} parent=0 // pred_region
    _
  $region57: #{ivp_forward.1} parent=0 // pred_fallthru
    _
  // Predicated region
  $region58: #{ivp_forward.1} parent=0 // pred_check
    _
  $region59: #{ivp_forward.1} parent=0 // pred_check_branch
    %1230 = sbr.rel (0) target = $region61
  $region60: #{ivp_forward.1} parent=0 // pred_region
    _
  $region61: #{ivp_forward.1} parent=0 // pred_fallthru
    _

</llo_original>
